<compile_context>
chip_gen: v7x
topology: tpu7x:2x2x1
jax: 0.10.0
libtpu: 0.0.40
codegen_flags: <defaults>
</compile_context>

<pallas_src>
import functools

import jax
import jax.numpy as jnp
from jax import lax
from jax.experimental import pallas as pl
from jax.experimental.pallas import tpu as pltpu

EPS = 1e-5
_PADL = 8  # left halo offset in the scratch: keeps the interior store aligned.


# ---------------------------------------------------------------------------
# Fused Pallas kernel: expand(1x1) + depthwise(3x3) + project(1x1) + residual
# ---------------------------------------------------------------------------
def _fused_block_kernel(*refs, has_expand, use_res, dw_stride, dense_out):
    if has_expand:
        (x_ref, w_exp_ref, b_exp_ref, w_dw_ref, b_dw_ref,
         w_pr_ref, b_pr_ref, o_ref, pad_ref) = refs
    else:
        (x_ref, w_dw_ref, b_dw_ref, w_pr_ref, b_pr_ref, o_ref, pad_ref) = refs

    _, H, W, C_in = x_ref.shape
    C_hid = pad_ref.shape[2]
    C_out = w_pr_ref.shape[1]
    Ho = (H - 1) // dw_stride + 1
    Wo = (W - 1) // dw_stride + 1
    M = H * W

    # ---- expand: 1x1 conv (BN folded) + ReLU6 (MXU, bf16 in / f32 acc) -------
    x2d = None  # f32 rows of the input, kept only for the residual add
    if has_expand:
        if use_res:
            x2d = x_ref[0].reshape(M, C_in)                  # f32 for residual
            xb = x2d.astype(jnp.bfloat16)
        else:
            # bf16 operand straight from the block: no f32->bf16 round trip.
            xb = x_ref[0].astype(jnp.bfloat16).reshape(M, C_in)
        h2d = jnp.dot(xb, w_exp_ref[...], preferred_element_type=jnp.float32)
        hidden = jnp.clip(h2d + b_exp_ref[...], 0.0, 6.0).reshape(H, W, C_hid)
    else:
        hidden = x_ref[0].astype(jnp.float32)                # C_hid == C_in
        if use_res:
            x2d = hidden.reshape(M, C_in)

    # ---- halo handling in the persistent VMEM scratch ------------------------
    # Only the 1-wide border strips are zeroed per step (cheap); the interior
    # is fully overwritten each step at an aligned column offset (_PADL == 8).
    # NOTE: a pl.when(program_id==0) zero-once would break if the "parallel"
    # batch axis is split across TensorCores (per-core scratch).
    Wp = pad_ref.shape[1]
    c_lo, c_hi = _PADL - 1, _PADL + W
    row_zero = jnp.zeros((1, Wp, C_hid), jnp.float32)
    col_zero = jnp.zeros((H + 2, 1, C_hid), jnp.float32)
    pad_ref[0:1, :, :] = row_zero
    pad_ref[H + 1:H + 2, :, :] = row_zero
    pad_ref[:, c_lo:c_lo + 1, :] = col_zero
    pad_ref[:, c_hi:c_hi + 1, :] = col_zero
    pad_ref[1:H + 1, _PADL:_PADL + W, :] = hidden

    # ---- depthwise 3x3 conv (BN folded) + ReLU6, f32 on the VPU --------------
    # 3 column-shifted loads (one per kw); row offsets are free on the leading
    # dim.  For stride 2 the output positions are computed directly via a
    # sublane-strided column load + leading-dim slab selection.
    w_dw = w_dw_ref[...]                                     # (3, 3, C_hid)
    b_dw = b_dw_ref[...].reshape(1, 1, C_hid)
    acc = None
    for kw in range(3):
        if dw_stride == 1:
            col = pad_ref[:, c_lo + kw:c_lo + kw + W, :]             # (H+2, W,  C)
        else:
            col = pad_ref[:, pl.ds(c_lo + kw, Wo, dw_stride), :]     # (H+2, Wo, C)
        for kh in range(3):
            rows = col[kh:kh + H]
            if dw_stride == 2:
                rows = rows.reshape(Ho, 2, Wo, C_hid)[:, 0]          # even rows
            term = rows * w_dw[kh, kw]
            acc = (term + b_dw) if acc is None else (acc + term)     # bias fused
    dw = jnp.clip(acc, 0.0, 6.0)

    # ---- project: 1x1 conv (BN folded), fused residual, lane-dense store -----
    y2d = jnp.dot(dw.reshape(Ho * Wo, C_hid).astype(jnp.bfloat16), w_pr_ref[...],
                  preferred_element_type=jnp.float32) + b_pr_ref[...]
    if use_res:
        y2d = y2d + x2d
    if dense_out:
        # Last block dim = Wo*C_out (>=128 for MobileNetV2 shapes) -> unmasked
        # stores; the wrapper's reshape back to (N, Ho, Wo, C_out) is free.
        o_ref[0] = y2d.reshape(Ho, Wo * C_out).astype(o_ref.dtype)
    else:
        o_ref[0] = y2d.reshape(Ho, Wo, C_out).astype(o_ref.dtype)


# ---------------------------------------------------------------------------
# Wrapper
# ---------------------------------------------------------------------------
def _fold_bn(gamma, beta, mean, var):
    scale = gamma / jnp.sqrt(var + EPS)
    bias = beta - mean * scale
    return scale, bias


def _vmem_limit_bytes(needed):
    """Scoped-VMEM request: >= what the kernel needs, <= ~75% of physical
    capacity (headroom for compiler scratch; v7x has 64 MiB vs 128 on v5e/v6e)."""
    try:
        cap = int(pltpu.get_tpu_info().vmem_capacity_bytes)
    except Exception:
        cap = 64 * 1024 * 1024
    return int(min(max(needed, 32 * 1024 * 1024), int(cap * 0.75)))


def inverted_residual_nhwc(x_nhwc, params, *, stride, expand_ratio):
    """Fused MobileNetV2 InvertedResidual forward (eval-mode BN), NHWC layout."""
    assert stride in (1, 2)
    N, H, W, C_in = x_nhwc.shape
    has_expand = expand_ratio != 1
    C_hid = params["w_dw"].shape[0]
    C_out = params["w_proj"].shape[0]
    if not has_expand:
        assert C_hid == C_in
    use_res = (stride == 1) and (C_in == C_out)

    # Fold BN (inference) into the conv weights host-side; matmul weights go to
    # bf16 for the MXU, biases stay f32.
    in_specs = [pl.BlockSpec((1, H, W, C_in), lambda n: (n, 0, 0, 0))]
    args = [x_nhwc]
    if has_expand:
        s, b = _fold_bn(*params["bn_exp"])
        w_exp = (params["w_exp"][:, :, 0, 0].T * s[None, :]).astype(jnp.bfloat16)
        in_specs += [pl.BlockSpec((C_in, C_hid), lambda n: (0, 0)),
                     pl.BlockSpec((1, C_hid), lambda n: (0, 0))]
        args += [w_exp, b.reshape(1, C_hid).astype(jnp.float32)]
    s, b = _fold_bn(*params["bn_dw"])
    w_dw = (jnp.transpose(params["w_dw"][:, 0], (1, 2, 0)) * s).astype(jnp.float32)
    in_specs += [pl.BlockSpec((3, 3, C_hid), lambda n: (0, 0, 0)),
                 pl.BlockSpec((1, C_hid), lambda n: (0, 0))]
    args += [w_dw, b.reshape(1, C_hid).astype(jnp.float32)]
    s, b = _fold_bn(*params["bn_proj"])
    w_pr = (params["w_proj"][:, :, 0, 0].T * s[None, :]).astype(jnp.bfloat16)
    in_specs += [pl.BlockSpec((C_hid, C_out), lambda n: (0, 0)),
                 pl.BlockSpec((1, C_out), lambda n: (0, 0))]
    args += [w_pr, b.reshape(1, C_out).astype(jnp.float32)]

    weight_bytes = sum(int(a.size) * a.dtype.itemsize for a in args[1:])

    def run(dw_stride, dense_out):
        Ho = (H - 1) // dw_stride + 1
        Wo = (W - 1) // dw_stride + 1
        kernel = functools.partial(_fused_block_kernel, has_expand=has_expand,
                                   use_res=use_res, dw_stride=dw_stride,
                                   dense_out=dense_out)
        if dense_out:
            out_shape = jax.ShapeDtypeStruct((N, Ho, Wo * C_out), x_nhwc.dtype)
            out_spec = pl.BlockSpec((1, Ho, Wo * C_out), lambda n: (n, 0, 0))
        else:
            out_shape = jax.ShapeDtypeStruct((N, Ho, Wo, C_out), x_nhwc.dtype)
            out_spec = pl.BlockSpec((1, Ho, Wo, C_out), lambda n: (n, 0, 0, 0))

        # VMEM footprint: double-buffered I/O blocks + padded scratch + ~6
        # simultaneously live hidden-size f32 temporaries + folded weights.
        itm = x_nhwc.dtype.itemsize
        need = 2 * (H * W * C_in + Ho * Wo * C_out) * itm
        need += (H + 2) * (W + _PADL + 1) * C_hid * 4
        need += 6 * H * W * C_hid * 4
        need += weight_bytes

        flops = N * ((2 * H * W * C_in * C_hid if has_expand else 0)
                     + 18 * Ho * Wo * C_hid
                     + 2 * Ho * Wo * C_hid * C_out)
        bytes_accessed = sum(int(a.size) * a.dtype.itemsize for a in args)
        bytes_accessed += N * Ho * Wo * C_out * x_nhwc.dtype.itemsize

        out = pl.pallas_call(
            kernel,
            out_shape=out_shape,
            grid=(N,),
            in_specs=in_specs,
            out_specs=out_spec,
            scratch_shapes=[pltpu.VMEM((H + 2, W + _PADL + 1, C_hid),
                                       jnp.float32)],
            compiler_params=pltpu.CompilerParams(
                dimension_semantics=("parallel",),
                vmem_limit_bytes=_vmem_limit_bytes(int(need * 1.25))),
            cost_estimate=pl.CostEstimate(flops=flops, transcendentals=0,
                                          bytes_accessed=bytes_accessed),
        )(*args)
        return out.reshape(N, Ho, Wo, C_out)  # free (row-major) reshape

    # Preference order: in-kernel stride-2 + lane-dense store, then graceful
    # fallbacks for toolchains that reject sublane-strided ref loads or
    # minor-dim-changing reshapes (fallback = stride-1 compute + wrapper
    # subsample of the final, smallest tensor).
    if stride == 2 and H % 2 == 0 and W % 2 == 0:
        candidates = [(2, True), (2, False), (1, True), (1, False)]
    else:
        candidates = [(1, True), (1, False)]

    out, used_stride = None, 1
    for idx, (dw_s, dense) in enumerate(candidates):
        try:
            out = run(dw_s, dense)
            jax.block_until_ready(out)
            used_stride = dw_s
            break
        except Exception:
            if idx == len(candidates) - 1:
                raise
    if stride == 2 and used_stride == 1:
        # k=3/pad=1 stride-2 output == stride-1 output subsampled at [::2, ::2].
        out = out[:, ::2, ::2, :]
    return out


def inverted_residual(x_nchw, params, *, stride, expand_ratio):
    """NCHW wrapper matching the PyTorch module's layout (transposes are glue;
    use inverted_residual_nhwc directly in an NHWC network)."""
    x = jnp.transpose(x_nchw, (0, 2, 3, 1))  # NCHW -> NHWC
    y = inverted_residual_nhwc(x, params, stride=stride, expand_ratio=expand_ratio)
    return jnp.transpose(y, (0, 3, 1, 2))    # NHWC -> NCHW


# ---------------------------------------------------------------------------
# Deterministic parameter init (PyTorch layouts: OIHW conv weights)
# ---------------------------------------------------------------------------
def _bn_params(key, c):
    k1, k2, k3, k4 = jax.random.split(key, 4)
    gamma = 1.0 + 0.1 * jax.random.normal(k1, (c,), jnp.float32)
    beta = 0.1 * jax.random.normal(k2, (c,), jnp.float32)
    mean = 0.05 * jax.random.normal(k3, (c,), jnp.float32)
    var = 0.5 + 0.25 * jnp.abs(jax.random.normal(k4, (c,), jnp.float32))
    return gamma, beta, mean, var


def make_params(key, inp, oup, expand_ratio):
    hidden = int(round(inp * expand_ratio))
    keys = jax.random.split(key, 6)
    p = {}
    if expand_ratio != 1:
        p["w_exp"] = 0.1 * jax.random.normal(keys[0], (hidden, inp, 1, 1), jnp.float32)
        p["bn_exp"] = _bn_params(keys[1], hidden)
    p["w_dw"] = 0.1 * jax.random.normal(keys[2], (hidden, 1, 3, 3), jnp.float32)
    p["bn_dw"] = _bn_params(keys[3], hidden)
    p["w_proj"] = 0.1 * jax.random.normal(keys[4], (oup, hidden, 1, 1), jnp.float32)
    p["bn_proj"] = _bn_params(keys[5], oup)
    return p


# ---------------------------------------------------------------------------
# Pure-JAX (XLA, f32) reference for correctness check
# ---------------------------------------------------------------------------
def _ref_conv(x, w, stride=1, pad=0, groups=1):
    return lax.conv_general_dilated(
        x, w, (stride, stride), [(pad, pad), (pad, pad)],
        dimension_numbers=("NCHW", "OIHW", "NCHW"),
        feature_group_count=groups)


def _ref_bn(x, bn):
    gamma, beta, mean, var = bn
    s = gamma / jnp.sqrt(var + EPS)
    b = beta - mean * s
    return x * s[None, :, None, None] + b[None, :, None, None]


def ref_inverted_residual(x, params, *, stride, expand_ratio):
    inp = x.shape[1]
    oup = params["w_proj"].shape[0]
    hidden = params["w_dw"].shape[0]
    use_res = (stride == 1) and (inp == oup)
    y = x
    if expand_ratio != 1:
        y = jnp.clip(_ref_bn(_ref_conv(y, params["w_exp"]), params["bn_exp"]), 0, 6)
    y = jnp.clip(_ref_bn(_ref_conv(y, params["w_dw"], stride=stride, pad=1,
                                   groups=hidden), params["bn_dw"]), 0, 6)
    y = _ref_bn(_ref_conv(y, params["w_proj"]), params["bn_proj"])
    return x + y if use_res else y


# ---------------------------------------------------------------------------
if __name__ == "__main__":
    key = jax.random.PRNGKey(0)
    kx1, kp1, kx2, kp2, kx3, kp3 = jax.random.split(key, 6)

    # Tolerance: kernel uses bf16 MXU inputs (f32 accumulation); reference is
    # pure f32, so allow a few e-2.  Real bugs produce O(0.1-1) errors.
    RTOL, ATOL = 5e-2, 5e-2

    # Case 1: stride=1, inp == oup, expand_ratio=4 -> residual connection.
    x1 = jax.random.normal(kx1, (2, 8, 16, 16), jnp.float32)  # NCHW
    p1 = make_params(kp1, inp=8, oup=8, expand_ratio=4)
    out1 = inverted_residual(x1, p1, stride=1, expand_ratio=4)
    ref1 = ref_inverted_residual(x1, p1, stride=1, expand_ratio=4)
    jax.block_until_ready(out1)
    assert out1.shape == ref1.shape == (2, 8, 16, 16)
    assert jnp.allclose(out1, ref1, rtol=RTOL, atol=ATOL), "stride=1 mismatch"

    # Case 2: stride=2, inp != oup -> no residual, in-kernel downsampling.
    x2 = jax.random.normal(kx2, (2, 8, 16, 16), jnp.float32)  # NCHW
    p2 = make_params(kp2, inp=8, oup=16, expand_ratio=4)
    out2 = inverted_residual(x2, p2, stride=2, expand_ratio=4)
    ref2 = ref_inverted_residual(x2, p2, stride=2, expand_ratio=4)
    jax.block_until_ready(out2)
    assert out2.shape == ref2.shape == (2, 16, 8, 8)
    assert jnp.allclose(out2, ref2, rtol=RTOL, atol=ATOL), "stride=2 mismatch"

    # Case 3: expand_ratio=1 (no expand conv), stride=1, inp == oup.
    x3 = jax.random.normal(kx3, (2, 16, 16, 16), jnp.float32)  # NCHW
    p3 = make_params(kp3, inp=16, oup=16, expand_ratio=1)
    out3 = inverted_residual(x3, p3, stride=1, expand_ratio=1)
    ref3 = ref_inverted_residual(x3, p3, stride=1, expand_ratio=1)
    jax.block_until_ready(out3)
    assert out3.shape == ref3.shape == (2, 16, 16, 16)
    assert jnp.allclose(out3, ref3, rtol=RTOL, atol=ATOL), "expand_ratio=1 mismatch"

    print("KERNEL_OK")
</pallas_src>

<mosaic_0001>
module attributes {stable_mosaic.version = 11 : i64} {
  func.func @_fused_block_kernel(%arg0: i32, %arg1: memref<1x16x16x8xf32, #tpu.memory_space<vmem>>, %arg2: memref<8x32xbf16, #tpu.memory_space<vmem>>, %arg3: memref<1x32xf32, #tpu.memory_space<vmem>>, %arg4: memref<3x3x32xf32, #tpu.memory_space<vmem>>, %arg5: memref<1x32xf32, #tpu.memory_space<vmem>>, %arg6: memref<32x8xbf16, #tpu.memory_space<vmem>>, %arg7: memref<1x8xf32, #tpu.memory_space<vmem>>, %arg8: memref<1x16x128xf32, #tpu.memory_space<vmem>>, %arg9: memref<18x25x32xf32, #tpu.memory_space<vmem>>) attributes {dimension_semantics = [#tpu.dimension_semantics<parallel>], iteration_bounds = array<i64: 2>, scalar_prefetch = 0 : i64, scratch_operands = 1 : i64, tpu.core_type = #tpu.core_type<tc>, window_params = [{transform_indices = @transform_0, window_bounds = array<i64: 1, 16, 16, 8>}, {pipeline_mode = #tpu.pipeline_mode<synchronous>, transform_indices = @transform_1, window_bounds = array<i64: 8, 32>}, {pipeline_mode = #tpu.pipeline_mode<synchronous>, transform_indices = @transform_2, window_bounds = array<i64: 1, 32>}, {pipeline_mode = #tpu.pipeline_mode<synchronous>, transform_indices = @transform_3, window_bounds = array<i64: 3, 3, 32>}, {pipeline_mode = #tpu.pipeline_mode<synchronous>, transform_indices = @transform_4, window_bounds = array<i64: 1, 32>}, {pipeline_mode = #tpu.pipeline_mode<synchronous>, transform_indices = @transform_5, window_bounds = array<i64: 32, 8>}, {pipeline_mode = #tpu.pipeline_mode<synchronous>, transform_indices = @transform_6, window_bounds = array<i64: 1, 8>}, {transform_indices = @transform_7, window_bounds = array<i64: 1, 16, 128>}]} {
    %c0 = arith.constant 0 : index
    %c0_0 = arith.constant 0 : index
    %c0_1 = arith.constant 0 : index
    %c0_2 = arith.constant 0 : index
    %0 = vector.load %arg1[%c0, %c0_0, %c0_1, %c0_2] : memref<1x16x16x8xf32, #tpu.memory_space<vmem>>, vector<1x16x16x8xf32>
    %1 = vector.shape_cast %0 : vector<1x16x16x8xf32> to vector<16x16x8xf32>
    %2 = vector.shape_cast %1 : vector<16x16x8xf32> to vector<256x8xf32>
    %3 = arith.truncf %2 : vector<256x8xf32> to vector<256x8xbf16>
    %c0_3 = arith.constant 0 : index
    %c0_4 = arith.constant 0 : index
    %4 = vector.load %arg2[%c0_3, %c0_4] : memref<8x32xbf16, #tpu.memory_space<vmem>>, vector<8x32xbf16>
    %cst = arith.constant dense<0.000000e+00> : vector<256x32xf32>
    %5 = tpu.matmul %3, %4, %cst {dimension_numbers = #tpu.dot_dimension_numbers<[1], [0], [0], [1], [0, 0, 1, 1], [], []>} : vector<256x8xbf16>, vector<8x32xbf16>, vector<256x32xf32> -> vector<256x32xf32>
    %c0_5 = arith.constant 0 : index
    %c0_6 = arith.constant 0 : index
    %6 = vector.load %arg3[%c0_5, %c0_6] : memref<1x32xf32, #tpu.memory_space<vmem>>, vector<1x32xf32>
    %7 = vector.broadcast %6 : vector<1x32xf32> to vector<256x32xf32>
    %8 = arith.addf %5, %7 : vector<256x32xf32>
    %cst_7 = arith.constant 0.000000e+00 : f32
    %cst_8 = arith.constant 6.000000e+00 : f32
    %9 = vector.broadcast %cst_7 : f32 to vector<256x32xf32>
    %10 = arith.maximumf %9, %8 : vector<256x32xf32>
    %11 = vector.broadcast %cst_8 : f32 to vector<256x32xf32>
    %12 = arith.minimumf %11, %10 : vector<256x32xf32>
    %13 = vector.shape_cast %12 : vector<256x32xf32> to vector<16x16x32xf32>
    %cst_9 = arith.constant 0.000000e+00 : f32
    %14 = vector.broadcast %cst_9 : f32 to vector<1x25x32xf32>
    %cst_10 = arith.constant 0.000000e+00 : f32
    %15 = vector.broadcast %cst_10 : f32 to vector<18x1x32xf32>
    %c0_11 = arith.constant 0 : index
    %c0_12 = arith.constant 0 : index
    %c0_13 = arith.constant 0 : index
    %16 = vector.load %arg9[%c0_11, %c0_12, %c0_13] : memref<18x25x32xf32, #tpu.memory_space<vmem>>, vector<1x25x32xf32>
    tpu.vector_store %arg9[%c0_11, %c0_12, %c0_13], %14 {strides = array<i32>} : memref<18x25x32xf32, #tpu.memory_space<vmem>>, vector<1x25x32xf32>,
    %c17 = arith.constant 17 : index
    %c0_14 = arith.constant 0 : index
    %c0_15 = arith.constant 0 : index
    %17 = vector.load %arg9[%c17, %c0_14, %c0_15] : memref<18x25x32xf32, #tpu.memory_space<vmem>>, vector<1x25x32xf32>
    tpu.vector_store %arg9[%c17, %c0_14, %c0_15], %14 {strides = array<i32>} : memref<18x25x32xf32, #tpu.memory_space<vmem>>, vector<1x25x32xf32>,
    %c0_16 = arith.constant 0 : index
    %c7 = arith.constant 7 : index
    %c0_17 = arith.constant 0 : index
    %18 = vector.load %arg9[%c0_16, %c7, %c0_17] : memref<18x25x32xf32, #tpu.memory_space<vmem>>, vector<18x1x32xf32>
    tpu.vector_store %arg9[%c0_16, %c7, %c0_17], %15 {strides = array<i32>} : memref<18x25x32xf32, #tpu.memory_space<vmem>>, vector<18x1x32xf32>,
    %c0_18 = arith.constant 0 : index
    %c24 = arith.constant 24 : index
    %c0_19 = arith.constant 0 : index
    %19 = vector.load %arg9[%c0_18, %c24, %c0_19] : memref<18x25x32xf32, #tpu.memory_space<vmem>>, vector<18x1x32xf32>
    tpu.vector_store %arg9[%c0_18, %c24, %c0_19], %15 {strides = array<i32>} : memref<18x25x32xf32, #tpu.memory_space<vmem>>, vector<18x1x32xf32>,
    %c1 = arith.constant 1 : index
    %c8 = arith.constant 8 : index
    %c0_20 = arith.constant 0 : index
    %20 = vector.load %arg9[%c1, %c8, %c0_20] : memref<18x25x32xf32, #tpu.memory_space<vmem>>, vector<16x16x32xf32>
    tpu.vector_store %arg9[%c1, %c8, %c0_20], %13 {strides = array<i32>} : memref<18x25x32xf32, #tpu.memory_space<vmem>>, vector<16x16x32xf32>,
    %c0_21 = arith.constant 0 : index
    %c0_22 = arith.constant 0 : index
    %c0_23 = arith.constant 0 : index
    %21 = vector.load %arg4[%c0_21, %c0_22, %c0_23] : memref<3x3x32xf32, #tpu.memory_space<vmem>>, vector<3x3x32xf32>
    %c0_24 = arith.constant 0 : index
    %c0_25 = arith.constant 0 : index
    %22 = vector.load %arg5[%c0_24, %c0_25] : memref<1x32xf32, #tpu.memory_space<vmem>>, vector<1x32xf32>
    %23 = vector.shape_cast %22 : vector<1x32xf32> to vector<1x1x32xf32>
    %c0_26 = arith.constant 0 : index
    %c7_27 = arith.constant 7 : index
    %c0_28 = arith.constant 0 : index
    %24 = vector.load %arg9[%c0_26, %c7_27, %c0_28] : memref<18x25x32xf32, #tpu.memory_space<vmem>>, vector<18x16x32xf32>
    %25 = vector.extract_strided_slice %24 {offsets = [0, 0, 0], sizes = [16, 16, 32], strides = [1, 1, 1]} : vector<18x16x32xf32> to vector<16x16x32xf32>
    %26 = vector.extract_strided_slice %21 {offsets = [0, 0, 0], sizes = [1, 1, 32], strides = [1, 1, 1]} : vector<3x3x32xf32> to vector<1x1x32xf32>
    %27 = vector.shape_cast %26 : vector<1x1x32xf32> to vector<32xf32>
    %28 = vector.shape_cast %27 : vector<32xf32> to vector<1x1x32xf32>
    %29 = vector.broadcast %28 : vector<1x1x32xf32> to vector<16x16x32xf32>
    %30 = arith.mulf %25, %29 : vector<16x16x32xf32>
    %31 = vector.broadcast %23 : vector<1x1x32xf32> to vector<16x16x32xf32>
    %32 = arith.addf %30, %31 : vector<16x16x32xf32>
    %33 = vector.extract_strided_slice %24 {offsets = [1, 0, 0], sizes = [16, 16, 32], strides = [1, 1, 1]} : vector<18x16x32xf32> to vector<16x16x32xf32>
    %34 = vector.extract_strided_slice %21 {offsets = [1, 0, 0], sizes = [1, 1, 32], strides = [1, 1, 1]} : vector<3x3x32xf32> to vector<1x1x32xf32>
    %35 = vector.shape_cast %34 : vector<1x1x32xf32> to vector<32xf32>
    %36 = vector.shape_cast %35 : vector<32xf32> to vector<1x1x32xf32>
    %37 = vector.broadcast %36 : vector<1x1x32xf32> to vector<16x16x32xf32>
    %38 = arith.mulf %33, %37 : vector<16x16x32xf32>
    %39 = arith.addf %32, %38 : vector<16x16x32xf32>
    %40 = vector.extract_strided_slice %24 {offsets = [2, 0, 0], sizes = [16, 16, 32], strides = [1, 1, 1]} : vector<18x16x32xf32> to vector<16x16x32xf32>
    %41 = vector.extract_strided_slice %21 {offsets = [2, 0, 0], sizes = [1, 1, 32], strides = [1, 1, 1]} : vector<3x3x32xf32> to vector<1x1x32xf32>
    %42 = vector.shape_cast %41 : vector<1x1x32xf32> to vector<32xf32>
    %43 = vector.shape_cast %42 : vector<32xf32> to vector<1x1x32xf32>
    %44 = vector.broadcast %43 : vector<1x1x32xf32> to vector<16x16x32xf32>
    %45 = arith.mulf %40, %44 : vector<16x16x32xf32>
    %46 = arith.addf %39, %45 : vector<16x16x32xf32>
    %c0_29 = arith.constant 0 : index
    %c8_30 = arith.constant 8 : index
    %c0_31 = arith.constant 0 : index
    %47 = vector.load %arg9[%c0_29, %c8_30, %c0_31] : memref<18x25x32xf32, #tpu.memory_space<vmem>>, vector<18x16x32xf32>
    %48 = vector.extract_strided_slice %47 {offsets = [0, 0, 0], sizes = [16, 16, 32], strides = [1, 1, 1]} : vector<18x16x32xf32> to vector<16x16x32xf32>
    %49 = vector.extract_strided_slice %21 {offsets = [0, 1, 0], sizes = [1, 1, 32], strides = [1, 1, 1]} : vector<3x3x32xf32> to vector<1x1x32xf32>
    %50 = vector.shape_cast %49 : vector<1x1x32xf32> to vector<32xf32>
    %51 = vector.shape_cast %50 : vector<32xf32> to vector<1x1x32xf32>
    %52 = vector.broadcast %51 : vector<1x1x32xf32> to vector<16x16x32xf32>
    %53 = arith.mulf %48, %52 : vector<16x16x32xf32>
    %54 = arith.addf %46, %53 : vector<16x16x32xf32>
    %55 = vector.extract_strided_slice %47 {offsets = [1, 0, 0], sizes = [16, 16, 32], strides = [1, 1, 1]} : vector<18x16x32xf32> to vector<16x16x32xf32>
    %56 = vector.extract_strided_slice %21 {offsets = [1, 1, 0], sizes = [1, 1, 32], strides = [1, 1, 1]} : vector<3x3x32xf32> to vector<1x1x32xf32>
    %57 = vector.shape_cast %56 : vector<1x1x32xf32> to vector<32xf32>
    %58 = vector.shape_cast %57 : vector<32xf32> to vector<1x1x32xf32>
    %59 = vector.broadcast %58 : vector<1x1x32xf32> to vector<16x16x32xf32>
    %60 = arith.mulf %55, %59 : vector<16x16x32xf32>
    %61 = arith.addf %54, %60 : vector<16x16x32xf32>
    %62 = vector.extract_strided_slice %47 {offsets = [2, 0, 0], sizes = [16, 16, 32], strides = [1, 1, 1]} : vector<18x16x32xf32> to vector<16x16x32xf32>
    %63 = vector.extract_strided_slice %21 {offsets = [2, 1, 0], sizes = [1, 1, 32], strides = [1, 1, 1]} : vector<3x3x32xf32> to vector<1x1x32xf32>
    %64 = vector.shape_cast %63 : vector<1x1x32xf32> to vector<32xf32>
    %65 = vector.shape_cast %64 : vector<32xf32> to vector<1x1x32xf32>
    %66 = vector.broadcast %65 : vector<1x1x32xf32> to vector<16x16x32xf32>
    %67 = arith.mulf %62, %66 : vector<16x16x32xf32>
    %68 = arith.addf %61, %67 : vector<16x16x32xf32>
    %c0_32 = arith.constant 0 : index
    %c9 = arith.constant 9 : index
    %c0_33 = arith.constant 0 : index
    %69 = vector.load %arg9[%c0_32, %c9, %c0_33] : memref<18x25x32xf32, #tpu.memory_space<vmem>>, vector<18x16x32xf32>
    %70 = vector.extract_strided_slice %69 {offsets = [0, 0, 0], sizes = [16, 16, 32], strides = [1, 1, 1]} : vector<18x16x32xf32> to vector<16x16x32xf32>
    %71 = vector.extract_strided_slice %21 {offsets = [0, 2, 0], sizes = [1, 1, 32], strides = [1, 1, 1]} : vector<3x3x32xf32> to vector<1x1x32xf32>
    %72 = vector.shape_cast %71 : vector<1x1x32xf32> to vector<32xf32>
    %73 = vector.shape_cast %72 : vector<32xf32> to vector<1x1x32xf32>
    %74 = vector.broadcast %73 : vector<1x1x32xf32> to vector<16x16x32xf32>
    %75 = arith.mulf %70, %74 : vector<16x16x32xf32>
    %76 = arith.addf %68, %75 : vector<16x16x32xf32>
    %77 = vector.extract_strided_slice %69 {offsets = [1, 0, 0], sizes = [16, 16, 32], strides = [1, 1, 1]} : vector<18x16x32xf32> to vector<16x16x32xf32>
    %78 = vector.extract_strided_slice %21 {offsets = [1, 2, 0], sizes = [1, 1, 32], strides = [1, 1, 1]} : vector<3x3x32xf32> to vector<1x1x32xf32>
    %79 = vector.shape_cast %78 : vector<1x1x32xf32> to vector<32xf32>
    %80 = vector.shape_cast %79 : vector<32xf32> to vector<1x1x32xf32>
    %81 = vector.broadcast %80 : vector<1x1x32xf32> to vector<16x16x32xf32>
    %82 = arith.mulf %77, %81 : vector<16x16x32xf32>
    %83 = arith.addf %76, %82 : vector<16x16x32xf32>
    %84 = vector.extract_strided_slice %69 {offsets = [2, 0, 0], sizes = [16, 16, 32], strides = [1, 1, 1]} : vector<18x16x32xf32> to vector<16x16x32xf32>
    %85 = vector.extract_strided_slice %21 {offsets = [2, 2, 0], sizes = [1, 1, 32], strides = [1, 1, 1]} : vector<3x3x32xf32> to vector<1x1x32xf32>
    %86 = vector.shape_cast %85 : vector<1x1x32xf32> to vector<32xf32>
    %87 = vector.shape_cast %86 : vector<32xf32> to vector<1x1x32xf32>
    %88 = vector.broadcast %87 : vector<1x1x32xf32> to vector<16x16x32xf32>
    %89 = arith.mulf %84, %88 : vector<16x16x32xf32>
    %90 = arith.addf %83, %89 : vector<16x16x32xf32>
    %cst_34 = arith.constant 0.000000e+00 : f32
    %cst_35 = arith.constant 6.000000e+00 : f32
    %91 = vector.broadcast %cst_34 : f32 to vector<16x16x32xf32>
    %92 = arith.maximumf %91, %90 : vector<16x16x32xf32>
    %93 = vector.broadcast %cst_35 : f32 to vector<16x16x32xf32>
    %94 = arith.minimumf %93, %92 : vector<16x16x32xf32>
    %95 = vector.shape_cast %94 : vector<16x16x32xf32> to vector<256x32xf32>
    %96 = arith.truncf %95 : vector<256x32xf32> to vector<256x32xbf16>
    %c0_36 = arith.constant 0 : index
    %c0_37 = arith.constant 0 : index
    %97 = vector.load %arg6[%c0_36, %c0_37] : memref<32x8xbf16, #tpu.memory_space<vmem>>, vector<32x8xbf16>
    %cst_38 = arith.constant dense<0.000000e+00> : vector<256x8xf32>
    %98 = tpu.matmul %96, %97, %cst_38 {dimension_numbers = #tpu.dot_dimension_numbers<[1], [0], [0], [1], [0, 0, 1, 1], [], []>} : vector<256x32xbf16>, vector<32x8xbf16>, vector<256x8xf32> -> vector<256x8xf32>
    %c0_39 = arith.constant 0 : index
    %c0_40 = arith.constant 0 : index
    %99 = vector.load %arg7[%c0_39, %c0_40] : memref<1x8xf32, #tpu.memory_space<vmem>>, vector<1x8xf32>
    %100 = vector.broadcast %99 : vector<1x8xf32> to vector<256x8xf32>
    %101 = arith.addf %98, %100 : vector<256x8xf32>
    %102 = arith.addf %101, %2 : vector<256x8xf32>
    %103 = vector.shape_cast %102 : vector<256x8xf32> to vector<16x128xf32>
    %c0_41 = arith.constant 0 : index
    %c0_42 = arith.constant 0 : index
    %c0_43 = arith.constant 0 : index
    %104 = vector.load %arg8[%c0_41, %c0_42, %c0_43] : memref<1x16x128xf32, #tpu.memory_space<vmem>>, vector<1x16x128xf32>
    %105 = vector.shape_cast %104 : vector<1x16x128xf32> to vector<16x128xf32>
    %106 = vector.shape_cast %103 : vector<16x128xf32> to vector<1x16x128xf32>
    tpu.vector_store %arg8[%c0_41, %c0_42, %c0_43], %106 {strides = array<i32>} : memref<1x16x128xf32, #tpu.memory_space<vmem>>, vector<1x16x128xf32>,
    return
  }
  func.func @transform_0(%arg0: i32) -> (i32, i32, i32, i32) {
    %c0_i32 = arith.constant 0 : i32
    %c0_i32_0 = arith.constant 0 : i32
    %c0_i32_1 = arith.constant 0 : i32
    %c0_i32_2 = arith.constant 0 : i32
    return %arg0, %c0_i32, %c0_i32_0, %c0_i32_1 : i32, i32, i32, i32
  }
  func.func @transform_1(%arg0: i32) -> (i32, i32) {
    %c0_i32 = arith.constant 0 : i32
    %c0_i32_0 = arith.constant 0 : i32
    %c0_i32_1 = arith.constant 0 : i32
    return %c0_i32, %c0_i32_0 : i32, i32
  }
  func.func @transform_2(%arg0: i32) -> (i32, i32) {
    %c0_i32 = arith.constant 0 : i32
    %c0_i32_0 = arith.constant 0 : i32
    %c0_i32_1 = arith.constant 0 : i32
    return %c0_i32, %c0_i32_0 : i32, i32
  }
  func.func @transform_3(%arg0: i32) -> (i32, i32, i32) {
    %c0_i32 = arith.constant 0 : i32
    %c0_i32_0 = arith.constant 0 : i32
    %c0_i32_1 = arith.constant 0 : i32
    %c0_i32_2 = arith.constant 0 : i32
    return %c0_i32, %c0_i32_0, %c0_i32_1 : i32, i32, i32
  }
  func.func @transform_4(%arg0: i32) -> (i32, i32) {
    %c0_i32 = arith.constant 0 : i32
    %c0_i32_0 = arith.constant 0 : i32
    %c0_i32_1 = arith.constant 0 : i32
    return %c0_i32, %c0_i32_0 : i32, i32
  }
  func.func @transform_5(%arg0: i32) -> (i32, i32) {
    %c0_i32 = arith.constant 0 : i32
    %c0_i32_0 = arith.constant 0 : i32
    %c0_i32_1 = arith.constant 0 : i32
    return %c0_i32, %c0_i32_0 : i32, i32
  }
  func.func @transform_6(%arg0: i32) -> (i32, i32) {
    %c0_i32 = arith.constant 0 : i32
    %c0_i32_0 = arith.constant 0 : i32
    %c0_i32_1 = arith.constant 0 : i32
    return %c0_i32, %c0_i32_0 : i32, i32
  }
  func.func @transform_7(%arg0: i32) -> (i32, i32, i32) {
    %c0_i32 = arith.constant 0 : i32
    %c0_i32_0 = arith.constant 0 : i32
    %c0_i32_1 = arith.constant 0 : i32
    return %arg0, %c0_i32, %c0_i32_0 : i32, i32, i32
  }
}

module attributes {stable_mosaic.version = 11 : i64} {
  func.func @_fused_block_kernel(%arg0: i32, %arg1: memref<1x16x16x8xf32, #tpu.memory_space<vmem>>, %arg2: memref<8x32xbf16, #tpu.memory_space<vmem>>, %arg3: memref<1x32xf32, #tpu.memory_space<vmem>>, %arg4: memref<3x3x32xf32, #tpu.memory_space<vmem>>, %arg5: memref<1x32xf32, #tpu.memory_space<vmem>>, %arg6: memref<32x8xbf16, #tpu.memory_space<vmem>>, %arg7: memref<1x8xf32, #tpu.memory_space<vmem>>, %arg8: memref<1x16x16x8xf32, #tpu.memory_space<vmem>>, %arg9: memref<18x25x32xf32, #tpu.memory_space<vmem>>) attributes {dimension_semantics = [#tpu.dimension_semantics<parallel>], iteration_bounds = array<i64: 2>, scalar_prefetch = 0 : i64, scratch_operands = 1 : i64, tpu.core_type = #tpu.core_type<tc>, window_params = [{transform_indices = @transform_0, window_bounds = array<i64: 1, 16, 16, 8>}, {pipeline_mode = #tpu.pipeline_mode<synchronous>, transform_indices = @transform_1, window_bounds = array<i64: 8, 32>}, {pipeline_mode = #tpu.pipeline_mode<synchronous>, transform_indices = @transform_2, window_bounds = array<i64: 1, 32>}, {pipeline_mode = #tpu.pipeline_mode<synchronous>, transform_indices = @transform_3, window_bounds = array<i64: 3, 3, 32>}, {pipeline_mode = #tpu.pipeline_mode<synchronous>, transform_indices = @transform_4, window_bounds = array<i64: 1, 32>}, {pipeline_mode = #tpu.pipeline_mode<synchronous>, transform_indices = @transform_5, window_bounds = array<i64: 32, 8>}, {pipeline_mode = #tpu.pipeline_mode<synchronous>, transform_indices = @transform_6, window_bounds = array<i64: 1, 8>}, {transform_indices = @transform_7, window_bounds = array<i64: 1, 16, 16, 8>}]} {
    %c0 = arith.constant 0 : index
    %c0_0 = arith.constant 0 : index
    %c0_1 = arith.constant 0 : index
    %c0_2 = arith.constant 0 : index
    %0 = vector.load %arg1[%c0, %c0_0, %c0_1, %c0_2] : memref<1x16x16x8xf32, #tpu.memory_space<vmem>>, vector<1x16x16x8xf32>
    %1 = vector.shape_cast %0 : vector<1x16x16x8xf32> to vector<16x16x8xf32>
    %2 = vector.shape_cast %1 : vector<16x16x8xf32> to vector<256x8xf32>
    %3 = arith.truncf %2 : vector<256x8xf32> to vector<256x8xbf16>
    %c0_3 = arith.constant 0 : index
    %c0_4 = arith.constant 0 : index
    %4 = vector.load %arg2[%c0_3, %c0_4] : memref<8x32xbf16, #tpu.memory_space<vmem>>, vector<8x32xbf16>
    %cst = arith.constant dense<0.000000e+00> : vector<256x32xf32>
    %5 = tpu.matmul %3, %4, %cst {dimension_numbers = #tpu.dot_dimension_numbers<[1], [0], [0], [1], [0, 0, 1, 1], [], []>} : vector<256x8xbf16>, vector<8x32xbf16>, vector<256x32xf32> -> vector<256x32xf32>
    %c0_5 = arith.constant 0 : index
    %c0_6 = arith.constant 0 : index
    %6 = vector.load %arg3[%c0_5, %c0_6] : memref<1x32xf32, #tpu.memory_space<vmem>>, vector<1x32xf32>
    %7 = vector.broadcast %6 : vector<1x32xf32> to vector<256x32xf32>
    %8 = arith.addf %5, %7 : vector<256x32xf32>
    %cst_7 = arith.constant 0.000000e+00 : f32
    %cst_8 = arith.constant 6.000000e+00 : f32
    %9 = vector.broadcast %cst_7 : f32 to vector<256x32xf32>
    %10 = arith.maximumf %9, %8 : vector<256x32xf32>
    %11 = vector.broadcast %cst_8 : f32 to vector<256x32xf32>
    %12 = arith.minimumf %11, %10 : vector<256x32xf32>
    %13 = vector.shape_cast %12 : vector<256x32xf32> to vector<16x16x32xf32>
    %cst_9 = arith.constant 0.000000e+00 : f32
    %14 = vector.broadcast %cst_9 : f32 to vector<1x25x32xf32>
    %cst_10 = arith.constant 0.000000e+00 : f32
    %15 = vector.broadcast %cst_10 : f32 to vector<18x1x32xf32>
    %c0_11 = arith.constant 0 : index
    %c0_12 = arith.constant 0 : index
    %c0_13 = arith.constant 0 : index
    %16 = vector.load %arg9[%c0_11, %c0_12, %c0_13] : memref<18x25x32xf32, #tpu.memory_space<vmem>>, vector<1x25x32xf32>
    tpu.vector_store %arg9[%c0_11, %c0_12, %c0_13], %14 {strides = array<i32>} : memref<18x25x32xf32, #tpu.memory_space<vmem>>, vector<1x25x32xf32>,
    %c17 = arith.constant 17 : index
    %c0_14 = arith.constant 0 : index
    %c0_15 = arith.constant 0 : index
    %17 = vector.load %arg9[%c17, %c0_14, %c0_15] : memref<18x25x32xf32, #tpu.memory_space<vmem>>, vector<1x25x32xf32>
    tpu.vector_store %arg9[%c17, %c0_14, %c0_15], %14 {strides = array<i32>} : memref<18x25x32xf32, #tpu.memory_space<vmem>>, vector<1x25x32xf32>,
    %c0_16 = arith.constant 0 : index
    %c7 = arith.constant 7 : index
    %c0_17 = arith.constant 0 : index
    %18 = vector.load %arg9[%c0_16, %c7, %c0_17] : memref<18x25x32xf32, #tpu.memory_space<vmem>>, vector<18x1x32xf32>
    tpu.vector_store %arg9[%c0_16, %c7, %c0_17], %15 {strides = array<i32>} : memref<18x25x32xf32, #tpu.memory_space<vmem>>, vector<18x1x32xf32>,
    %c0_18 = arith.constant 0 : index
    %c24 = arith.constant 24 : index
    %c0_19 = arith.constant 0 : index
    %19 = vector.load %arg9[%c0_18, %c24, %c0_19] : memref<18x25x32xf32, #tpu.memory_space<vmem>>, vector<18x1x32xf32>
    tpu.vector_store %arg9[%c0_18, %c24, %c0_19], %15 {strides = array<i32>} : memref<18x25x32xf32, #tpu.memory_space<vmem>>, vector<18x1x32xf32>,
    %c1 = arith.constant 1 : index
    %c8 = arith.constant 8 : index
    %c0_20 = arith.constant 0 : index
    %20 = vector.load %arg9[%c1, %c8, %c0_20] : memref<18x25x32xf32, #tpu.memory_space<vmem>>, vector<16x16x32xf32>
    tpu.vector_store %arg9[%c1, %c8, %c0_20], %13 {strides = array<i32>} : memref<18x25x32xf32, #tpu.memory_space<vmem>>, vector<16x16x32xf32>,
    %c0_21 = arith.constant 0 : index
    %c0_22 = arith.constant 0 : index
    %c0_23 = arith.constant 0 : index
    %21 = vector.load %arg4[%c0_21, %c0_22, %c0_23] : memref<3x3x32xf32, #tpu.memory_space<vmem>>, vector<3x3x32xf32>
    %c0_24 = arith.constant 0 : index
    %c0_25 = arith.constant 0 : index
    %22 = vector.load %arg5[%c0_24, %c0_25] : memref<1x32xf32, #tpu.memory_space<vmem>>, vector<1x32xf32>
    %23 = vector.shape_cast %22 : vector<1x32xf32> to vector<1x1x32xf32>
    %c0_26 = arith.constant 0 : index
    %c7_27 = arith.constant 7 : index
    %c0_28 = arith.constant 0 : index
    %24 = vector.load %arg9[%c0_26, %c7_27, %c0_28] : memref<18x25x32xf32, #tpu.memory_space<vmem>>, vector<18x16x32xf32>
    %25 = vector.extract_strided_slice %24 {offsets = [0, 0, 0], sizes = [16, 16, 32], strides = [1, 1, 1]} : vector<18x16x32xf32> to vector<16x16x32xf32>
    %26 = vector.extract_strided_slice %21 {offsets = [0, 0, 0], sizes = [1, 1, 32], strides = [1, 1, 1]} : vector<3x3x32xf32> to vector<1x1x32xf32>
    %27 = vector.shape_cast %26 : vector<1x1x32xf32> to vector<32xf32>
    %28 = vector.shape_cast %27 : vector<32xf32> to vector<1x1x32xf32>
    %29 = vector.broadcast %28 : vector<1x1x32xf32> to vector<16x16x32xf32>
    %30 = arith.mulf %25, %29 : vector<16x16x32xf32>
    %31 = vector.broadcast %23 : vector<1x1x32xf32> to vector<16x16x32xf32>
    %32 = arith.addf %30, %31 : vector<16x16x32xf32>
    %33 = vector.extract_strided_slice %24 {offsets = [1, 0, 0], sizes = [16, 16, 32], strides = [1, 1, 1]} : vector<18x16x32xf32> to vector<16x16x32xf32>
    %34 = vector.extract_strided_slice %21 {offsets = [1, 0, 0], sizes = [1, 1, 32], strides = [1, 1, 1]} : vector<3x3x32xf32> to vector<1x1x32xf32>
    %35 = vector.shape_cast %34 : vector<1x1x32xf32> to vector<32xf32>
    %36 = vector.shape_cast %35 : vector<32xf32> to vector<1x1x32xf32>
    %37 = vector.broadcast %36 : vector<1x1x32xf32> to vector<16x16x32xf32>
    %38 = arith.mulf %33, %37 : vector<16x16x32xf32>
    %39 = arith.addf %32, %38 : vector<16x16x32xf32>
    %40 = vector.extract_strided_slice %24 {offsets = [2, 0, 0], sizes = [16, 16, 32], strides = [1, 1, 1]} : vector<18x16x32xf32> to vector<16x16x32xf32>
    %41 = vector.extract_strided_slice %21 {offsets = [2, 0, 0], sizes = [1, 1, 32], strides = [1, 1, 1]} : vector<3x3x32xf32> to vector<1x1x32xf32>
    %42 = vector.shape_cast %41 : vector<1x1x32xf32> to vector<32xf32>
    %43 = vector.shape_cast %42 : vector<32xf32> to vector<1x1x32xf32>
    %44 = vector.broadcast %43 : vector<1x1x32xf32> to vector<16x16x32xf32>
    %45 = arith.mulf %40, %44 : vector<16x16x32xf32>
    %46 = arith.addf %39, %45 : vector<16x16x32xf32>
    %c0_29 = arith.constant 0 : index
    %c8_30 = arith.constant 8 : index
    %c0_31 = arith.constant 0 : index
    %47 = vector.load %arg9[%c0_29, %c8_30, %c0_31] : memref<18x25x32xf32, #tpu.memory_space<vmem>>, vector<18x16x32xf32>
    %48 = vector.extract_strided_slice %47 {offsets = [0, 0, 0], sizes = [16, 16, 32], strides = [1, 1, 1]} : vector<18x16x32xf32> to vector<16x16x32xf32>
    %49 = vector.extract_strided_slice %21 {offsets = [0, 1, 0], sizes = [1, 1, 32], strides = [1, 1, 1]} : vector<3x3x32xf32> to vector<1x1x32xf32>
    %50 = vector.shape_cast %49 : vector<1x1x32xf32> to vector<32xf32>
    %51 = vector.shape_cast %50 : vector<32xf32> to vector<1x1x32xf32>
    %52 = vector.broadcast %51 : vector<1x1x32xf32> to vector<16x16x32xf32>
    %53 = arith.mulf %48, %52 : vector<16x16x32xf32>
    %54 = arith.addf %46, %53 : vector<16x16x32xf32>
    %55 = vector.extract_strided_slice %47 {offsets = [1, 0, 0], sizes = [16, 16, 32], strides = [1, 1, 1]} : vector<18x16x32xf32> to vector<16x16x32xf32>
    %56 = vector.extract_strided_slice %21 {offsets = [1, 1, 0], sizes = [1, 1, 32], strides = [1, 1, 1]} : vector<3x3x32xf32> to vector<1x1x32xf32>
    %57 = vector.shape_cast %56 : vector<1x1x32xf32> to vector<32xf32>
    %58 = vector.shape_cast %57 : vector<32xf32> to vector<1x1x32xf32>
    %59 = vector.broadcast %58 : vector<1x1x32xf32> to vector<16x16x32xf32>
    %60 = arith.mulf %55, %59 : vector<16x16x32xf32>
    %61 = arith.addf %54, %60 : vector<16x16x32xf32>
    %62 = vector.extract_strided_slice %47 {offsets = [2, 0, 0], sizes = [16, 16, 32], strides = [1, 1, 1]} : vector<18x16x32xf32> to vector<16x16x32xf32>
    %63 = vector.extract_strided_slice %21 {offsets = [2, 1, 0], sizes = [1, 1, 32], strides = [1, 1, 1]} : vector<3x3x32xf32> to vector<1x1x32xf32>
    %64 = vector.shape_cast %63 : vector<1x1x32xf32> to vector<32xf32>
    %65 = vector.shape_cast %64 : vector<32xf32> to vector<1x1x32xf32>
    %66 = vector.broadcast %65 : vector<1x1x32xf32> to vector<16x16x32xf32>
    %67 = arith.mulf %62, %66 : vector<16x16x32xf32>
    %68 = arith.addf %61, %67 : vector<16x16x32xf32>
    %c0_32 = arith.constant 0 : index
    %c9 = arith.constant 9 : index
    %c0_33 = arith.constant 0 : index
    %69 = vector.load %arg9[%c0_32, %c9, %c0_33] : memref<18x25x32xf32, #tpu.memory_space<vmem>>, vector<18x16x32xf32>
    %70 = vector.extract_strided_slice %69 {offsets = [0, 0, 0], sizes = [16, 16, 32], strides = [1, 1, 1]} : vector<18x16x32xf32> to vector<16x16x32xf32>
    %71 = vector.extract_strided_slice %21 {offsets = [0, 2, 0], sizes = [1, 1, 32], strides = [1, 1, 1]} : vector<3x3x32xf32> to vector<1x1x32xf32>
    %72 = vector.shape_cast %71 : vector<1x1x32xf32> to vector<32xf32>
    %73 = vector.shape_cast %72 : vector<32xf32> to vector<1x1x32xf32>
    %74 = vector.broadcast %73 : vector<1x1x32xf32> to vector<16x16x32xf32>
    %75 = arith.mulf %70, %74 : vector<16x16x32xf32>
    %76 = arith.addf %68, %75 : vector<16x16x32xf32>
    %77 = vector.extract_strided_slice %69 {offsets = [1, 0, 0], sizes = [16, 16, 32], strides = [1, 1, 1]} : vector<18x16x32xf32> to vector<16x16x32xf32>
    %78 = vector.extract_strided_slice %21 {offsets = [1, 2, 0], sizes = [1, 1, 32], strides = [1, 1, 1]} : vector<3x3x32xf32> to vector<1x1x32xf32>
    %79 = vector.shape_cast %78 : vector<1x1x32xf32> to vector<32xf32>
    %80 = vector.shape_cast %79 : vector<32xf32> to vector<1x1x32xf32>
    %81 = vector.broadcast %80 : vector<1x1x32xf32> to vector<16x16x32xf32>
    %82 = arith.mulf %77, %81 : vector<16x16x32xf32>
    %83 = arith.addf %76, %82 : vector<16x16x32xf32>
    %84 = vector.extract_strided_slice %69 {offsets = [2, 0, 0], sizes = [16, 16, 32], strides = [1, 1, 1]} : vector<18x16x32xf32> to vector<16x16x32xf32>
    %85 = vector.extract_strided_slice %21 {offsets = [2, 2, 0], sizes = [1, 1, 32], strides = [1, 1, 1]} : vector<3x3x32xf32> to vector<1x1x32xf32>
    %86 = vector.shape_cast %85 : vector<1x1x32xf32> to vector<32xf32>
    %87 = vector.shape_cast %86 : vector<32xf32> to vector<1x1x32xf32>
    %88 = vector.broadcast %87 : vector<1x1x32xf32> to vector<16x16x32xf32>
    %89 = arith.mulf %84, %88 : vector<16x16x32xf32>
    %90 = arith.addf %83, %89 : vector<16x16x32xf32>
    %cst_34 = arith.constant 0.000000e+00 : f32
    %cst_35 = arith.constant 6.000000e+00 : f32
    %91 = vector.broadcast %cst_34 : f32 to vector<16x16x32xf32>
    %92 = arith.maximumf %91, %90 : vector<16x16x32xf32>
    %93 = vector.broadcast %cst_35 : f32 to vector<16x16x32xf32>
    %94 = arith.minimumf %93, %92 : vector<16x16x32xf32>
    %95 = vector.shape_cast %94 : vector<16x16x32xf32> to vector<256x32xf32>
    %96 = arith.truncf %95 : vector<256x32xf32> to vector<256x32xbf16>
    %c0_36 = arith.constant 0 : index
    %c0_37 = arith.constant 0 : index
    %97 = vector.load %arg6[%c0_36, %c0_37] : memref<32x8xbf16, #tpu.memory_space<vmem>>, vector<32x8xbf16>
    %cst_38 = arith.constant dense<0.000000e+00> : vector<256x8xf32>
    %98 = tpu.matmul %96, %97, %cst_38 {dimension_numbers = #tpu.dot_dimension_numbers<[1], [0], [0], [1], [0, 0, 1, 1], [], []>} : vector<256x32xbf16>, vector<32x8xbf16>, vector<256x8xf32> -> vector<256x8xf32>
    %c0_39 = arith.constant 0 : index
    %c0_40 = arith.constant 0 : index
    %99 = vector.load %arg7[%c0_39, %c0_40] : memref<1x8xf32, #tpu.memory_space<vmem>>, vector<1x8xf32>
    %100 = vector.broadcast %99 : vector<1x8xf32> to vector<256x8xf32>
    %101 = arith.addf %98, %100 : vector<256x8xf32>
    %102 = arith.addf %101, %2 : vector<256x8xf32>
    %103 = vector.shape_cast %102 : vector<256x8xf32> to vector<16x16x8xf32>
    %c0_41 = arith.constant 0 : index
    %c0_42 = arith.constant 0 : index
    %c0_43 = arith.constant 0 : index
    %c0_44 = arith.constant 0 : index
    %104 = vector.load %arg8[%c0_41, %c0_42, %c0_43, %c0_44] : memref<1x16x16x8xf32, #tpu.memory_space<vmem>>, vector<1x16x16x8xf32>
    %105 = vector.shape_cast %104 : vector<1x16x16x8xf32> to vector<16x16x8xf32>
    %106 = vector.shape_cast %103 : vector<16x16x8xf32> to vector<1x16x16x8xf32>
    tpu.vector_store %arg8[%c0_41, %c0_42, %c0_43, %c0_44], %106 {strides = array<i32>} : memref<1x16x16x8xf32, #tpu.memory_space<vmem>>, vector<1x16x16x8xf32>,
    return
  }
  func.func @transform_0(%arg0: i32) -> (i32, i32, i32, i32) {
    %c0_i32 = arith.constant 0 : i32
    %c0_i32_0 = arith.constant 0 : i32
    %c0_i32_1 = arith.constant 0 : i32
    %c0_i32_2 = arith.constant 0 : i32
    return %arg0, %c0_i32, %c0_i32_0, %c0_i32_1 : i32, i32, i32, i32
  }
  func.func @transform_1(%arg0: i32) -> (i32, i32) {
    %c0_i32 = arith.constant 0 : i32
    %c0_i32_0 = arith.constant 0 : i32
    %c0_i32_1 = arith.constant 0 : i32
    return %c0_i32, %c0_i32_0 : i32, i32
  }
  func.func @transform_2(%arg0: i32) -> (i32, i32) {
    %c0_i32 = arith.constant 0 : i32
    %c0_i32_0 = arith.constant 0 : i32
    %c0_i32_1 = arith.constant 0 : i32
    return %c0_i32, %c0_i32_0 : i32, i32
  }
  func.func @transform_3(%arg0: i32) -> (i32, i32, i32) {
    %c0_i32 = arith.constant 0 : i32
    %c0_i32_0 = arith.constant 0 : i32
    %c0_i32_1 = arith.constant 0 : i32
    %c0_i32_2 = arith.constant 0 : i32
    return %c0_i32, %c0_i32_0, %c0_i32_1 : i32, i32, i32
  }
  func.func @transform_4(%arg0: i32) -> (i32, i32) {
    %c0_i32 = arith.constant 0 : i32
    %c0_i32_0 = arith.constant 0 : i32
    %c0_i32_1 = arith.constant 0 : i32
    return %c0_i32, %c0_i32_0 : i32, i32
  }
  func.func @transform_5(%arg0: i32) -> (i32, i32) {
    %c0_i32 = arith.constant 0 : i32
    %c0_i32_0 = arith.constant 0 : i32
    %c0_i32_1 = arith.constant 0 : i32
    return %c0_i32, %c0_i32_0 : i32, i32
  }
  func.func @transform_6(%arg0: i32) -> (i32, i32) {
    %c0_i32 = arith.constant 0 : i32
    %c0_i32_0 = arith.constant 0 : i32
    %c0_i32_1 = arith.constant 0 : i32
    return %c0_i32, %c0_i32_0 : i32, i32
  }
  func.func @transform_7(%arg0: i32) -> (i32, i32, i32, i32) {
    %c0_i32 = arith.constant 0 : i32
    %c0_i32_0 = arith.constant 0 : i32
    %c0_i32_1 = arith.constant 0 : i32
    %c0_i32_2 = arith.constant 0 : i32
    return %arg0, %c0_i32, %c0_i32_0, %c0_i32_1 : i32, i32, i32, i32
  }
}

</mosaic_0001>

<llo_original>
// kernel: tpu_custom_call.1
$region0: #{tpu_custom_call.1}
  #allocation0 [shape = 'u32[]', space=smem, size = 0x4, offset = 0x4, fixed_abs, tag = 'smem constant byte address 0x4 - core index']
  #allocation1 [shape = 'u32[144,128]{1,0:T(1,128)}', space=vmem, size = 0x12000, scoped, tag = 'internal scratch']
  #allocation2 [shape = 'f32[18,25,32]{2,1,0:T(8,128)}', space=vmem, size = 0x48000, scoped, tag = 'scratch operand']
  %s0 = inlined_call_operand.vmem [shape: f32[2,16,16,8], index: 0, kind: input, shape index: {}]
  %s1 = inlined_call_operand.vmem [shape: bf16[8,32], index: 1, kind: input, shape index: {}]
  %s2 = inlined_call_operand.vmem [shape: f32[1,32], index: 2, kind: input, shape index: {}]
  %s3 = inlined_call_operand.vmem [shape: f32[3,3,32], index: 3, kind: input, shape index: {}]
  %s4 = inlined_call_operand.vmem [shape: f32[1,32], index: 4, kind: input, shape index: {}]
  %s5 = inlined_call_operand.vmem [shape: bf16[32,8], index: 5, kind: input, shape index: {}]
  %s6 = inlined_call_operand.vmem [shape: f32[1,8], index: 6, kind: input, shape index: {}]
  %s7 = inlined_call_operand.vmem [shape: f32[2,16,16,8], index: 7, kind: output, shape index: {}]
  %s8 = sld [smem:[#allocation0]]
  $region61: #{tpu_custom_call.1} parent=0
    _
  %s10 = ssub.s32 1, %s8
  %s11 = scalar_select 0, %s10, %s8
  loop: start=0, step=1, limit=4
  $region2: #{tpu_custom_call.1} parent=0 // loop_pre_header
    _
  $region3: #{tpu_custom_call.1} parent=0 // loop_header
    %s13 = sphi 0, %s17
    %p14 = scmp.ge.s32.totalorder %s13, 4
    %s23 = sphi 0, %s25
    %s26 = sphi 0, %s23
    %s27 = sphi 0, %s26
    %s43 = sphi 0, %s27
    %s47 = sphi 0, %s47
    %s49 = sphi 0, %s47
    %s50 = sphi 0, %s49
    %s64 = sphi 0, %s50
    %s68 = sphi 0, %s68
    %s70 = sphi 0, %s68
    %s71 = sphi 0, %s70
    %s85 = sphi 0, %s71
    %s89 = sphi 0, %s89
    %s91 = sphi 0, %s89
    %s92 = sphi 0, %s91
    %s106 = sphi 0, %s92
    %s110 = sphi 0, %s110
    %s112 = sphi 0, %s110
    %s113 = sphi 0, %s112
    %s127 = sphi 0, %s113
    %s131 = sphi 0, %s131
    %s133 = sphi 0, %s131
    %s134 = sphi 0, %s133
    %s148 = sphi 0, %s134
    %s152 = sphi 0, %s152
    %s154 = sphi 0, %s152
    %s155 = sphi 0, %s154
    %s169 = sphi 0, %s155
    %s175 = sphi 0, %s177
    %s178 = sphi 0, %s175
    %s179 = sphi 0, %s178
    %s195 = sphi 0, %s179
  $region4: #{tpu_custom_call.1} parent=0 // loop_header_branch
    %16 = sbr.rel (%p14) target = $region8
  $region5: #{tpu_custom_call.1} parent=0 // loop_body
    %s18 = ssub.s32 %s13, 1
    %s19 = ssub.s32 %s13, 2
    %s20 = sadd.s32 %s13, 1
    %s21 = ssub.s32 %s13, %s20
    %p22 = scmp.eq.s32.totalorder %s21, 0
    %s24 = sadd.s32 %s23, 1
    %s25 = scalar_select %p22, %s23, %s24
    %p28 = pneg %p22
    %p29 = scmp.eq.s32.totalorder %s13, 1
    %p30 = por %p28, %p29
    %p31 = scmp.ne.s32.totalorder %s23, %s26
    %p32 = scmp.eq.s32.totalorder %s13, 0
    %p33 = por %p31, %p32
    %p34 = scmp.ne.s32.totalorder %s23, %s26
    %p35 = scmp.eq.s32.totalorder %s18, 1
    %p36 = por %p34, %p35
    %p37 = scmp.ne.s32.totalorder %s26, %s27
    %p38 = scmp.eq.s32.totalorder %s18, 0
    %p39 = por %p37, %p38
    %p40 = scmp.ne.s32.totalorder %s26, %s27
    %p41 = scmp.eq.s32.totalorder %s19, 1
    %p42 = por %p40, %p41
    %p44 = scmp.ne.s32.totalorder %s27, %s43
    %p45 = scmp.eq.s32.totalorder %s19, 0
    %p46 = por %p44, %p45
    %s48 = sadd.s32 %s47, 1
    %p51 = scmp.eq.s32.totalorder %s13, 1
    %p52 = scmp.ne.s32.totalorder %s47, %s49
    %p53 = scmp.eq.s32.totalorder %s13, 0
    %p54 = por %p52, %p53
    %p55 = scmp.ne.s32.totalorder %s47, %s49
    %p56 = scmp.eq.s32.totalorder %s18, 1
    %p57 = por %p55, %p56
    %p58 = scmp.ne.s32.totalorder %s49, %s50
    %p59 = scmp.eq.s32.totalorder %s18, 0
    %p60 = por %p58, %p59
    %p61 = scmp.ne.s32.totalorder %s49, %s50
    %p62 = scmp.eq.s32.totalorder %s19, 1
    %p63 = por %p61, %p62
    %p65 = scmp.ne.s32.totalorder %s50, %s64
    %p66 = scmp.eq.s32.totalorder %s19, 0
    %p67 = por %p65, %p66
    %s69 = sadd.s32 %s68, 1
    %p72 = scmp.eq.s32.totalorder %s13, 1
    %p73 = scmp.ne.s32.totalorder %s68, %s70
    %p74 = scmp.eq.s32.totalorder %s13, 0
    %p75 = por %p73, %p74
    %p76 = scmp.ne.s32.totalorder %s68, %s70
    %p77 = scmp.eq.s32.totalorder %s18, 1
    %p78 = por %p76, %p77
    %p79 = scmp.ne.s32.totalorder %s70, %s71
    %p80 = scmp.eq.s32.totalorder %s18, 0
    %p81 = por %p79, %p80
    %p82 = scmp.ne.s32.totalorder %s70, %s71
    %p83 = scmp.eq.s32.totalorder %s19, 1
    %p84 = por %p82, %p83
    %p86 = scmp.ne.s32.totalorder %s71, %s85
    %p87 = scmp.eq.s32.totalorder %s19, 0
    %p88 = por %p86, %p87
    %s90 = sadd.s32 %s89, 1
    %p93 = scmp.eq.s32.totalorder %s13, 1
    %p94 = scmp.ne.s32.totalorder %s89, %s91
    %p95 = scmp.eq.s32.totalorder %s13, 0
    %p96 = por %p94, %p95
    %p97 = scmp.ne.s32.totalorder %s89, %s91
    %p98 = scmp.eq.s32.totalorder %s18, 1
    %p99 = por %p97, %p98
    %p100 = scmp.ne.s32.totalorder %s91, %s92
    %p101 = scmp.eq.s32.totalorder %s18, 0
    %p102 = por %p100, %p101
    %p103 = scmp.ne.s32.totalorder %s91, %s92
    %p104 = scmp.eq.s32.totalorder %s19, 1
    %p105 = por %p103, %p104
    %p107 = scmp.ne.s32.totalorder %s92, %s106
    %p108 = scmp.eq.s32.totalorder %s19, 0
    %p109 = por %p107, %p108
    %s111 = sadd.s32 %s110, 1
    %p114 = scmp.eq.s32.totalorder %s13, 1
    %p115 = scmp.ne.s32.totalorder %s110, %s112
    %p116 = scmp.eq.s32.totalorder %s13, 0
    %p117 = por %p115, %p116
    %p118 = scmp.ne.s32.totalorder %s110, %s112
    %p119 = scmp.eq.s32.totalorder %s18, 1
    %p120 = por %p118, %p119
    %p121 = scmp.ne.s32.totalorder %s112, %s113
    %p122 = scmp.eq.s32.totalorder %s18, 0
    %p123 = por %p121, %p122
    %p124 = scmp.ne.s32.totalorder %s112, %s113
    %p125 = scmp.eq.s32.totalorder %s19, 1
    %p126 = por %p124, %p125
    %p128 = scmp.ne.s32.totalorder %s113, %s127
    %p129 = scmp.eq.s32.totalorder %s19, 0
    %p130 = por %p128, %p129
    %s132 = sadd.s32 %s131, 1
    %p135 = scmp.eq.s32.totalorder %s13, 1
    %p136 = scmp.ne.s32.totalorder %s131, %s133
    %p137 = scmp.eq.s32.totalorder %s13, 0
    %p138 = por %p136, %p137
    %p139 = scmp.ne.s32.totalorder %s131, %s133
    %p140 = scmp.eq.s32.totalorder %s18, 1
    %p141 = por %p139, %p140
    %p142 = scmp.ne.s32.totalorder %s133, %s134
    %p143 = scmp.eq.s32.totalorder %s18, 0
    %p144 = por %p142, %p143
    %p145 = scmp.ne.s32.totalorder %s133, %s134
    %p146 = scmp.eq.s32.totalorder %s19, 1
    %p147 = por %p145, %p146
    %p149 = scmp.ne.s32.totalorder %s134, %s148
    %p150 = scmp.eq.s32.totalorder %s19, 0
    %p151 = por %p149, %p150
    %s153 = sadd.s32 %s152, 1
    %p156 = scmp.eq.s32.totalorder %s13, 1
    %p157 = scmp.ne.s32.totalorder %s152, %s154
    %p158 = scmp.eq.s32.totalorder %s13, 0
    %p159 = por %p157, %p158
    %p160 = scmp.ne.s32.totalorder %s152, %s154
    %p161 = scmp.eq.s32.totalorder %s18, 1
    %p162 = por %p160, %p161
    %p163 = scmp.ne.s32.totalorder %s154, %s155
    %p164 = scmp.eq.s32.totalorder %s18, 0
    %p165 = por %p163, %p164
    %p166 = scmp.ne.s32.totalorder %s154, %s155
    %p167 = scmp.eq.s32.totalorder %s19, 1
    %p168 = por %p166, %p167
    %p170 = scmp.ne.s32.totalorder %s155, %s169
    %p171 = scmp.eq.s32.totalorder %s19, 0
    %p172 = por %p170, %p171
    %s173 = ssub.s32 %s13, %s20
    %p174 = scmp.eq.s32.totalorder %s173, 0
    %s176 = sadd.s32 %s175, 1
    %s177 = scalar_select %p174, %s175, %s176
    %p180 = pneg %p174
    %p181 = scmp.eq.s32.totalorder %s13, 1
    %p182 = por %p180, %p181
    %p183 = scmp.ne.s32.totalorder %s175, %s178
    %p184 = scmp.eq.s32.totalorder %s13, 0
    %p185 = por %p183, %p184
    %p186 = scmp.ne.s32.totalorder %s175, %s178
    %p187 = scmp.eq.s32.totalorder %s18, 1
    %p188 = por %p186, %p187
    %p189 = scmp.ne.s32.totalorder %s178, %s179
    %p190 = scmp.eq.s32.totalorder %s18, 0
    %p191 = por %p189, %p190
    %p192 = scmp.ne.s32.totalorder %s178, %s179
    %p193 = scmp.eq.s32.totalorder %s19, 1
    %p194 = por %p192, %p193
    %p196 = scmp.ne.s32.totalorder %s179, %s195
    %p197 = scmp.eq.s32.totalorder %s19, 0
    %p198 = por %p196, %p197
    %p199 = scmp.le.s32.totalorder 1, %s13
    %p200 = scmp.lt.s32.totalorder %s13, 3
    %p201 = pnand %p199, %p200
    %p202 = pneg %p201
    // Predicated region
    $region9: #{tpu_custom_call.1} parent=5 // pred_check
      _
    $region10: #{tpu_custom_call.1} parent=5 // pred_check_branch
      %204 = sbr.rel (%p201) target = $region12
    $region11: #{tpu_custom_call.1} parent=5 // pred_region
      %s205 = ssub.s32 %s13, 1
      // Predicated region
      $region13: #{tpu_custom_call.1} parent=11 // pred_check
        %p206 = pneg %p60
      $region14: #{tpu_custom_call.1} parent=11 // pred_check_branch
        %208 = sbr.rel (%p206) target = $region16
      $region15: #{tpu_custom_call.1} parent=11 // pred_region
        _
      $region16: #{tpu_custom_call.1} parent=11 // pred_fallthru
        _
      // Predicated region
      $region17: #{tpu_custom_call.1} parent=11 // pred_check
        %p209 = pneg %p81
      $region18: #{tpu_custom_call.1} parent=11 // pred_check_branch
        %211 = sbr.rel (%p209) target = $region20
      $region19: #{tpu_custom_call.1} parent=11 // pred_region
        _
      $region20: #{tpu_custom_call.1} parent=11 // pred_fallthru
        _
      // Predicated region
      $region21: #{tpu_custom_call.1} parent=11 // pred_check
        %p212 = pneg %p102
      $region22: #{tpu_custom_call.1} parent=11 // pred_check_branch
        %214 = sbr.rel (%p212) target = $region24
      $region23: #{tpu_custom_call.1} parent=11 // pred_region
        _
      $region24: #{tpu_custom_call.1} parent=11 // pred_fallthru
        _
      // Predicated region
      $region25: #{tpu_custom_call.1} parent=11 // pred_check
        %p215 = pneg %p123
      $region26: #{tpu_custom_call.1} parent=11 // pred_check_branch
        %217 = sbr.rel (%p215) target = $region28
      $region27: #{tpu_custom_call.1} parent=11 // pred_region
        _
      $region28: #{tpu_custom_call.1} parent=11 // pred_fallthru
        _
      // Predicated region
      $region29: #{tpu_custom_call.1} parent=11 // pred_check
        %p218 = pneg %p144
      $region30: #{tpu_custom_call.1} parent=11 // pred_check_branch
        %220 = sbr.rel (%p218) target = $region32
      $region31: #{tpu_custom_call.1} parent=11 // pred_region
        _
      $region32: #{tpu_custom_call.1} parent=11 // pred_fallthru
        _
      // Predicated region
      $region33: #{tpu_custom_call.1} parent=11 // pred_check
        %p221 = pneg %p165
      $region34: #{tpu_custom_call.1} parent=11 // pred_check_branch
        %223 = sbr.rel (%p221) target = $region36
      $region35: #{tpu_custom_call.1} parent=11 // pred_region
        _
      $region36: #{tpu_custom_call.1} parent=11 // pred_fallthru
        _
    $region12: #{tpu_custom_call.1} parent=5 // pred_fallthru
      _
    %p224 = scmp.lt.s32.totalorder %s13, 2
    // Predicated region
    $region37: #{tpu_custom_call.1} parent=5 // pred_check
      %p225 = pneg %p224
    $region38: #{tpu_custom_call.1} parent=5 // pred_check_branch
      %227 = sbr.rel (%p225) target = $region40
    $region39: #{tpu_custom_call.1} parent=5 // pred_region
      // Predicated region
      $region41: #{tpu_custom_call.1} parent=39 // pred_check
        %p228 = pneg %p33
      $region42: #{tpu_custom_call.1} parent=39 // pred_check_branch
        %230 = sbr.rel (%p228) target = $region44
      $region43: #{tpu_custom_call.1} parent=39 // pred_region
        %p231 = scmp.lt.s32.totalorder %s13, 1
        %s232 = scalar_select %p231, %s13, 1
        %s233 = smul.addr %s232, 32
        %s234 = smul.addr %s233, 8
        %s235 = scalar_lea.vmem %s0, %s234
      $region44: #{tpu_custom_call.1} parent=39 // pred_fallthru
        _
    $region40: #{tpu_custom_call.1} parent=5 // pred_fallthru
      _
    %p236 = scmp.le.s32.totalorder 1, %s13
    %p237 = scmp.lt.s32.totalorder %s13, 3
    %p238 = pnand %p236, %p237
    %p239 = pneg %p238
    // Predicated region
    $region45: #{tpu_custom_call.1} parent=5 // pred_check
      _
    $region46: #{tpu_custom_call.1} parent=5 // pred_check_branch
      %241 = sbr.rel (%p238) target = $region48
    $region47: #{tpu_custom_call.1} parent=5 // pred_region
      %s242 = ssub.s32 %s13, 1
      %p243 = scmp.lt.s32.totalorder %s18, 1
      %s244 = scalar_select %p243, %s18, 1
      %s245 = smul.addr %s244, 32
      %s246 = smul.addr %s245, 8
      %s247 = scalar_lea.vmem %s0, %s246
      %p248 = pneg %p39
      %p249 = pneg %p36
      %p250 = pneg %p60
      %p251 = pneg %p57
      %p252 = pneg %p81
      %p253 = pneg %p78
      %p254 = pneg %p102
      %p255 = pneg %p99
      %p256 = pneg %p123
      %p257 = pneg %p120
      %p258 = pneg %p144
      %p259 = pneg %p141
      %p260 = pneg %p165
      %p261 = pneg %p162
      %p262 = pneg %p191
      %p263 = pneg %p188
      %p264 = scmp.lt.s32.totalorder %s18, 1
      %s265 = scalar_select %p264, %s18, 1
      %s266 = smul.addr %s265, 32
      %s267 = smul.addr %s266, 8
      %s268 = scalar_lea.vmem %s7, %s267
      %p269 = scmp.lt.s32.totalorder %s18, 1
      %s270 = scalar_select %p269, %s18, 1
      %s271 = smul.addr %s270, 32
      %s272 = smul.addr %s271, 8
      %s273 = scalar_lea.vmem %s0, %s272
      %p274 = scmp.lt.s32.totalorder %s18, 1
      %s275 = scalar_select %p274, %s18, 1
      %s276 = smul.addr %s275, 32
      %s277 = smul.addr %s276, 8
      %s278 = scalar_lea.vmem %s7, %s277
      %v280 = vld [vmem:[%s273] sm:$0xff]
      %v281 = vld [vmem:[%s273 + $0x8] sm:$0xff]
      %v282 = vld [vmem:[%s273 + $0x10] sm:$0xff]
      %v283 = vld [vmem:[%s273 + $0x18] sm:$0xff]
      %v284 = vld [vmem:[%s273 + $0x20] sm:$0xff]
      %v285 = vld [vmem:[%s273 + $0x28] sm:$0xff]
      %v286 = vld [vmem:[%s273 + $0x30] sm:$0xff]
      %v287 = vld [vmem:[%s273 + $0x38] sm:$0xff]
      %v288 = vld [vmem:[%s273 + $0x40] sm:$0xff]
      %v289 = vld [vmem:[%s273 + $0x48] sm:$0xff]
      %v290 = vld [vmem:[%s273 + $0x50] sm:$0xff]
      %v291 = vld [vmem:[%s273 + $0x58] sm:$0xff]
      %v292 = vld [vmem:[%s273 + $0x60] sm:$0xff]
      %v293 = vld [vmem:[%s273 + $0x68] sm:$0xff]
      %v294 = vld [vmem:[%s273 + $0x70] sm:$0xff]
      %v295 = vld [vmem:[%s273 + $0x78] sm:$0xff]
      %v296 = vld [vmem:[%s273 + $0x80] sm:$0xff]
      %v297 = vld [vmem:[%s273 + $0x88] sm:$0xff]
      %v298 = vld [vmem:[%s273 + $0x90] sm:$0xff]
      %v299 = vld [vmem:[%s273 + $0x98] sm:$0xff]
      %v300 = vld [vmem:[%s273 + $0xa0] sm:$0xff]
      %v301 = vld [vmem:[%s273 + $0xa8] sm:$0xff]
      %v302 = vld [vmem:[%s273 + $0xb0] sm:$0xff]
      %v303 = vld [vmem:[%s273 + $0xb8] sm:$0xff]
      %v304 = vld [vmem:[%s273 + $0xc0] sm:$0xff]
      %v305 = vld [vmem:[%s273 + $0xc8] sm:$0xff]
      %v306 = vld [vmem:[%s273 + $0xd0] sm:$0xff]
      %v307 = vld [vmem:[%s273 + $0xd8] sm:$0xff]
      %v308 = vld [vmem:[%s273 + $0xe0] sm:$0xff]
      %v309 = vld [vmem:[%s273 + $0xe8] sm:$0xff]
      %v310 = vld [vmem:[%s273 + $0xf0] sm:$0xff]
      %v311 = vld [vmem:[%s273 + $0xf8] sm:$0xff]
      %v312 = vpack.c.bf16 %v281, %v280
      %v313 = vpack.c.bf16 %v283, %v282
      %v314 = vpack.c.bf16 %v285, %v284
      %v315 = vpack.c.bf16 %v287, %v286
      %v316 = vpack.c.bf16 %v289, %v288
      %v317 = vpack.c.bf16 %v291, %v290
      %v318 = vpack.c.bf16 %v293, %v292
      %v319 = vpack.c.bf16 %v295, %v294
      %v320 = vpack.c.bf16 %v297, %v296
      %v321 = vpack.c.bf16 %v299, %v298
      %v322 = vpack.c.bf16 %v301, %v300
      %v323 = vpack.c.bf16 %v303, %v302
      %v324 = vpack.c.bf16 %v305, %v304
      %v325 = vpack.c.bf16 %v307, %v306
      %v326 = vpack.c.bf16 %v309, %v308
      %v327 = vpack.c.bf16 %v311, %v310
      %v328 = vld [vmem:[%s1] sm:$0xf]
      %v329 = vld [vmem:[%s2] sm:$0x1]
      %v331 = vlaneseq
      %v332 = vshrl.u32 %v331, 7
      %v333 = vsub.s32 0, %v332
      %v334 = vrot.slane %v329, %v333
      %vm336 = vcmask 64512
      %v338 = vsel %vm336, %v312, 0
      %v341 = vsel %vm336, %v313, 0
      %v344 = vsel %vm336, %v314, 0
      %v347 = vsel %vm336, %v315, 0
      %v350 = vsel %vm336, %v316, 0
      %v353 = vsel %vm336, %v317, 0
      %v356 = vsel %vm336, %v318, 0
      %v359 = vsel %vm336, %v319, 0
      %v362 = vsel %vm336, %v320, 0
      %v365 = vsel %vm336, %v321, 0
      %v368 = vsel %vm336, %v322, 0
      %v371 = vsel %vm336, %v323, 0
      %v374 = vsel %vm336, %v324, 0
      %v377 = vsel %vm336, %v325, 0
      %v380 = vsel %vm336, %v326, 0
      %v383 = vsel %vm336, %v327, 0
      %vm385 = vcmask 1043456
      %v387 = vsel %vm385, %v328, 0
      %389 = vmatprep.subr.bf16.mxu0 0
      %390 = vmatpush1.bf16.msra.mxu0 %v387
      %391 = vmatprep.subr.bf16.mxu0 0
      %392 = vmatpush1.bf16.msra.mxu0 0
      %393 = vmatprep.subr.bf16.mxu0 0
      %394 = vmatpush1.bf16.msra.mxu0 0
      %395 = vmatprep.subr.bf16.mxu0 0
      %396 = vmatpush1.bf16.msra.mxu0 0
      %397 = vmatprep.subr.bf16.mxu0 0
      %398 = vmatpush1.bf16.msra.mxu0 0
      %399 = vmatprep.subr.bf16.mxu0 0
      %400 = vmatpush1.bf16.msra.mxu0 0
      %401 = vmatprep.subr.bf16.mxu0 0
      %402 = vmatpush1.bf16.msra.mxu0 0
      %403 = vmatprep.subr.bf16.mxu0 0
      %404 = vmatpush1.bf16.msra.mxu0 0
      %405 = vmatprep.subr.bf16.mxu0 0
      %406 = vmatpush1.bf16.msra.mxu0 0
      %407 = vmatprep.subr.bf16.mxu0 0
      %408 = vmatpush1.bf16.msra.mxu0 0
      %409 = vmatprep.subr.bf16.mxu0 0
      %410 = vmatpush1.bf16.msra.mxu0 0
      %411 = vmatprep.subr.bf16.mxu0 0
      %412 = vmatpush1.bf16.msra.mxu0 0
      %413 = vmatprep.subr.bf16.mxu0 0
      %414 = vmatpush1.bf16.msra.mxu0 0
      %415 = vmatprep.subr.bf16.mxu0 0
      %416 = vmatpush1.bf16.msra.mxu0 0
      %417 = vmatprep.subr.bf16.mxu0 0
      %418 = vmatpush1.bf16.msra.mxu0 0
      %419 = vmatprep.subr.bf16.mxu0 0
      %420 = vmatpush1.bf16.msra.mxu0 0
      %421 = vmatprep.mubr.bf16.mxu0 0
      %422 = vmatmul.mubr.bf16.gmra.mrb[0].mxu0 %v338
      %v423 = vpop.f32.mrb[0].mxu0
      %v424 = vadd.f32 %v334, %v423
      %v425 = vpop.f32.mrb[0].mxu0
      %v426 = vpop.f32.mrb[0].mxu0
      %v427 = vadd.f32 %v334, %v426
      %v428 = vpop.f32.mrb[0].mxu0
      %429 = vmatprep.mubr.bf16.mxu0 0
      %430 = vmatmul.mubr.bf16.gmra.mrb[0].mxu0 %v341
      %v431 = vpop.f32.mrb[0].mxu0
      %v432 = vadd.f32 %v334, %v431
      %v433 = vpop.f32.mrb[0].mxu0
      %v434 = vpop.f32.mrb[0].mxu0
      %v435 = vadd.f32 %v334, %v434
      %v436 = vpop.f32.mrb[0].mxu0
      %437 = vmatprep.mubr.bf16.mxu0 0
      %438 = vmatmul.mubr.bf16.gmra.mrb[0].mxu0 %v344
      %v439 = vpop.f32.mrb[0].mxu0
      %v440 = vadd.f32 %v334, %v439
      %v441 = vpop.f32.mrb[0].mxu0
      %v442 = vpop.f32.mrb[0].mxu0
      %v443 = vadd.f32 %v334, %v442
      %v444 = vpop.f32.mrb[0].mxu0
      %445 = vmatprep.mubr.bf16.mxu0 0
      %446 = vmatmul.mubr.bf16.gmra.mrb[0].mxu0 %v347
      %v447 = vpop.f32.mrb[0].mxu0
      %v448 = vadd.f32 %v334, %v447
      %v449 = vpop.f32.mrb[0].mxu0
      %v450 = vpop.f32.mrb[0].mxu0
      %v451 = vadd.f32 %v334, %v450
      %v452 = vpop.f32.mrb[0].mxu0
      %453 = vmatprep.mubr.bf16.mxu0 0
      %454 = vmatmul.mubr.bf16.gmra.mrb[0].mxu0 %v350
      %v455 = vpop.f32.mrb[0].mxu0
      %v456 = vadd.f32 %v334, %v455
      %v457 = vpop.f32.mrb[0].mxu0
      %v458 = vpop.f32.mrb[0].mxu0
      %v459 = vadd.f32 %v334, %v458
      %v460 = vpop.f32.mrb[0].mxu0
      %461 = vmatprep.mubr.bf16.mxu0 0
      %462 = vmatmul.mubr.bf16.gmra.mrb[0].mxu0 %v353
      %v463 = vpop.f32.mrb[0].mxu0
      %v464 = vadd.f32 %v334, %v463
      %v465 = vpop.f32.mrb[0].mxu0
      %v466 = vpop.f32.mrb[0].mxu0
      %v467 = vadd.f32 %v334, %v466
      %v468 = vpop.f32.mrb[0].mxu0
      %469 = vmatprep.mubr.bf16.mxu0 0
      %470 = vmatmul.mubr.bf16.gmra.mrb[0].mxu0 %v356
      %v471 = vpop.f32.mrb[0].mxu0
      %v472 = vadd.f32 %v334, %v471
      %v473 = vpop.f32.mrb[0].mxu0
      %v474 = vpop.f32.mrb[0].mxu0
      %v475 = vadd.f32 %v334, %v474
      %v476 = vpop.f32.mrb[0].mxu0
      %477 = vmatprep.mubr.bf16.mxu0 0
      %478 = vmatmul.mubr.bf16.gmra.mrb[0].mxu0 %v359
      %v479 = vpop.f32.mrb[0].mxu0
      %v480 = vadd.f32 %v334, %v479
      %v481 = vpop.f32.mrb[0].mxu0
      %v482 = vpop.f32.mrb[0].mxu0
      %v483 = vadd.f32 %v334, %v482
      %v484 = vpop.f32.mrb[0].mxu0
      %485 = vmatprep.mubr.bf16.mxu0 0
      %486 = vmatmul.mubr.bf16.gmra.mrb[0].mxu0 %v362
      %v487 = vpop.f32.mrb[0].mxu0
      %v488 = vadd.f32 %v334, %v487
      %v489 = vpop.f32.mrb[0].mxu0
      %v490 = vpop.f32.mrb[0].mxu0
      %v491 = vadd.f32 %v334, %v490
      %v492 = vpop.f32.mrb[0].mxu0
      %493 = vmatprep.mubr.bf16.mxu0 0
      %494 = vmatmul.mubr.bf16.gmra.mrb[0].mxu0 %v365
      %v495 = vpop.f32.mrb[0].mxu0
      %v496 = vadd.f32 %v334, %v495
      %v497 = vpop.f32.mrb[0].mxu0
      %v498 = vpop.f32.mrb[0].mxu0
      %v499 = vadd.f32 %v334, %v498
      %v500 = vpop.f32.mrb[0].mxu0
      %501 = vmatprep.mubr.bf16.mxu0 0
      %502 = vmatmul.mubr.bf16.gmra.mrb[0].mxu0 %v368
      %v503 = vpop.f32.mrb[0].mxu0
      %v504 = vadd.f32 %v334, %v503
      %v505 = vpop.f32.mrb[0].mxu0
      %v506 = vpop.f32.mrb[0].mxu0
      %v507 = vadd.f32 %v334, %v506
      %v508 = vpop.f32.mrb[0].mxu0
      %509 = vmatprep.mubr.bf16.mxu0 0
      %510 = vmatmul.mubr.bf16.gmra.mrb[0].mxu0 %v371
      %v511 = vpop.f32.mrb[0].mxu0
      %v512 = vadd.f32 %v334, %v511
      %v513 = vpop.f32.mrb[0].mxu0
      %v514 = vpop.f32.mrb[0].mxu0
      %v515 = vadd.f32 %v334, %v514
      %v516 = vpop.f32.mrb[0].mxu0
      %517 = vmatprep.mubr.bf16.mxu0 0
      %518 = vmatmul.mubr.bf16.gmra.mrb[0].mxu0 %v374
      %v519 = vpop.f32.mrb[0].mxu0
      %v520 = vadd.f32 %v334, %v519
      %v521 = vpop.f32.mrb[0].mxu0
      %v522 = vpop.f32.mrb[0].mxu0
      %v523 = vadd.f32 %v334, %v522
      %v524 = vpop.f32.mrb[0].mxu0
      %525 = vmatprep.mubr.bf16.mxu0 0
      %526 = vmatmul.mubr.bf16.gmra.mrb[0].mxu0 %v377
      %v527 = vpop.f32.mrb[0].mxu0
      %v528 = vadd.f32 %v334, %v527
      %v529 = vpop.f32.mrb[0].mxu0
      %v530 = vpop.f32.mrb[0].mxu0
      %v531 = vadd.f32 %v334, %v530
      %v532 = vpop.f32.mrb[0].mxu0
      %533 = vmatprep.mubr.bf16.mxu0 0
      %534 = vmatmul.mubr.bf16.gmra.mrb[0].mxu0 %v380
      %v535 = vpop.f32.mrb[0].mxu0
      %v536 = vadd.f32 %v334, %v535
      %v537 = vpop.f32.mrb[0].mxu0
      %v538 = vpop.f32.mrb[0].mxu0
      %v539 = vadd.f32 %v334, %v538
      %v540 = vpop.f32.mrb[0].mxu0
      %541 = vmatprep.mubr.bf16.mxu0 0
      %542 = vmatmul.mubr.bf16.gmra.mrb[0].mxu0 %v383
      %v543 = vpop.f32.mrb[0].mxu0
      %v544 = vadd.f32 %v334, %v543
      %v545 = vpop.f32.mrb[0].mxu0
      %v546 = vpop.f32.mrb[0].mxu0
      %v547 = vadd.f32 %v334, %v546
      %v548 = vpop.f32.mrb[0].mxu0
      %549 = vdwg.mxu0
      %v550 = vmax.f32 %v424, 0.0
      %v551 = vmax.f32 %v427, 0.0
      %v552 = vmax.f32 %v432, 0.0
      %v553 = vmax.f32 %v435, 0.0
      %v554 = vmax.f32 %v440, 0.0
      %v555 = vmax.f32 %v443, 0.0
      %v556 = vmax.f32 %v448, 0.0
      %v557 = vmax.f32 %v451, 0.0
      %v558 = vmax.f32 %v456, 0.0
      %v559 = vmax.f32 %v459, 0.0
      %v560 = vmax.f32 %v464, 0.0
      %v561 = vmax.f32 %v467, 0.0
      %v562 = vmax.f32 %v472, 0.0
      %v563 = vmax.f32 %v475, 0.0
      %v564 = vmax.f32 %v480, 0.0
      %v565 = vmax.f32 %v483, 0.0
      %v566 = vmax.f32 %v488, 0.0
      %v567 = vmax.f32 %v491, 0.0
      %v568 = vmax.f32 %v496, 0.0
      %v569 = vmax.f32 %v499, 0.0
      %v570 = vmax.f32 %v504, 0.0
      %v571 = vmax.f32 %v507, 0.0
      %v572 = vmax.f32 %v512, 0.0
      %v573 = vmax.f32 %v515, 0.0
      %v574 = vmax.f32 %v520, 0.0
      %v575 = vmax.f32 %v523, 0.0
      %v576 = vmax.f32 %v528, 0.0
      %v577 = vmax.f32 %v531, 0.0
      %v578 = vmax.f32 %v536, 0.0
      %v579 = vmax.f32 %v539, 0.0
      %v580 = vmax.f32 %v544, 0.0
      %v581 = vmax.f32 %v547, 0.0
      %v582 = vmin.f32 %v550, 6.0
      %v583 = vmin.f32 %v551, 6.0
      %v584 = vmin.f32 %v552, 6.0
      %v585 = vmin.f32 %v553, 6.0
      %v586 = vmin.f32 %v554, 6.0
      %v587 = vmin.f32 %v555, 6.0
      %v588 = vmin.f32 %v556, 6.0
      %v589 = vmin.f32 %v557, 6.0
      %v590 = vmin.f32 %v558, 6.0
      %v591 = vmin.f32 %v559, 6.0
      %v592 = vmin.f32 %v560, 6.0
      %v593 = vmin.f32 %v561, 6.0
      %v594 = vmin.f32 %v562, 6.0
      %v595 = vmin.f32 %v563, 6.0
      %v596 = vmin.f32 %v564, 6.0
      %v597 = vmin.f32 %v565, 6.0
      %v598 = vmin.f32 %v566, 6.0
      %v599 = vmin.f32 %v567, 6.0
      %v600 = vmin.f32 %v568, 6.0
      %v601 = vmin.f32 %v569, 6.0
      %v602 = vmin.f32 %v570, 6.0
      %v603 = vmin.f32 %v571, 6.0
      %v604 = vmin.f32 %v572, 6.0
      %v605 = vmin.f32 %v573, 6.0
      %v606 = vmin.f32 %v574, 6.0
      %v607 = vmin.f32 %v575, 6.0
      %v608 = vmin.f32 %v576, 6.0
      %v609 = vmin.f32 %v577, 6.0
      %v610 = vmin.f32 %v578, 6.0
      %v611 = vmin.f32 %v579, 6.0
      %v612 = vmin.f32 %v580, 6.0
      %v613 = vmin.f32 %v581, 6.0
      %vm614 = vcmask 261120
      %615 = vst.msk [vmem:[#allocation2] sm:$0xff] %vm614, 0.0
      %616 = vst.msk [vmem:[#allocation2 + $0x8] sm:$0xff] %vm614, 0.0
      %617 = vst.msk [vmem:[#allocation2 + $0x10] sm:$0xff] %vm614, 0.0
      %vm618 = vcmask 253952
      %619 = vst.msk [vmem:[#allocation2 + $0x18] sm:$0x1] %vm618, 0.0
      %s620 = scalar_lea.vmem [#allocation2], 544
      %621 = vst.msk [vmem:[%s620] sm:$0xff] %vm614, 0.0
      %622 = vst.msk [vmem:[%s620 + $0x8] sm:$0xff] %vm614, 0.0
      %623 = vst.msk [vmem:[%s620 + $0x10] sm:$0xff] %vm614, 0.0
      %624 = vst.msk [vmem:[%s620 + $0x18] sm:$0x1] %vm618, 0.0
      %625 = vst.msk [vmem:[#allocation2 + $0x7] sm:$0x1] %vm618, 0.0
      %626 = vst.msk [vmem:[#allocation2 + $0x27] sm:$0x1] %vm618, 0.0
      %627 = vst.msk [vmem:[#allocation2 + $0x47] sm:$0x1] %vm618, 0.0
      %628 = vst.msk [vmem:[#allocation2 + $0x67] sm:$0x1] %vm618, 0.0
      %629 = vst.msk [vmem:[#allocation2 + $0x87] sm:$0x1] %vm618, 0.0
      %630 = vst.msk [vmem:[#allocation2 + $0xa7] sm:$0x1] %vm618, 0.0
      %631 = vst.msk [vmem:[#allocation2 + $0xc7] sm:$0x1] %vm618, 0.0
      %632 = vst.msk [vmem:[#allocation2 + $0xe7] sm:$0x1] %vm618, 0.0
      %633 = vst.msk [vmem:[#allocation2 + $0x107] sm:$0x1] %vm618, 0.0
      %634 = vst.msk [vmem:[#allocation2 + $0x127] sm:$0x1] %vm618, 0.0
      %635 = vst.msk [vmem:[#allocation2 + $0x147] sm:$0x1] %vm618, 0.0
      %636 = vst.msk [vmem:[#allocation2 + $0x167] sm:$0x1] %vm618, 0.0
      %637 = vst.msk [vmem:[#allocation2 + $0x187] sm:$0x1] %vm618, 0.0
      %638 = vst.msk [vmem:[#allocation2 + $0x1a7] sm:$0x1] %vm618, 0.0
      %639 = vst.msk [vmem:[#allocation2 + $0x1c7] sm:$0x1] %vm618, 0.0
      %640 = vst.msk [vmem:[#allocation2 + $0x1e7] sm:$0x1] %vm618, 0.0
      %641 = vst.msk [vmem:[#allocation2 + $0x207] sm:$0x1] %vm618, 0.0
      %642 = vst.msk [vmem:[#allocation2 + $0x227] sm:$0x1] %vm618, 0.0
      %643 = vst.msk [vmem:[#allocation2 + $0x18] sm:$0x1] %vm618, 0.0
      %644 = vst.msk [vmem:[#allocation2 + $0x38] sm:$0x1] %vm618, 0.0
      %645 = vst.msk [vmem:[#allocation2 + $0x58] sm:$0x1] %vm618, 0.0
      %646 = vst.msk [vmem:[#allocation2 + $0x78] sm:$0x1] %vm618, 0.0
      %647 = vst.msk [vmem:[#allocation2 + $0x98] sm:$0x1] %vm618, 0.0
      %648 = vst.msk [vmem:[#allocation2 + $0xb8] sm:$0x1] %vm618, 0.0
      %649 = vst.msk [vmem:[#allocation2 + $0xd8] sm:$0x1] %vm618, 0.0
      %650 = vst.msk [vmem:[#allocation2 + $0xf8] sm:$0x1] %vm618, 0.0
      %651 = vst.msk [vmem:[#allocation2 + $0x118] sm:$0x1] %vm618, 0.0
      %652 = vst.msk [vmem:[#allocation2 + $0x138] sm:$0x1] %vm618, 0.0
      %653 = vst.msk [vmem:[#allocation2 + $0x158] sm:$0x1] %vm618, 0.0
      %654 = vst.msk [vmem:[#allocation2 + $0x178] sm:$0x1] %vm618, 0.0
      %655 = vst.msk [vmem:[#allocation2 + $0x198] sm:$0x1] %vm618, 0.0
      %656 = vst.msk [vmem:[#allocation2 + $0x1b8] sm:$0x1] %vm618, 0.0
      %657 = vst.msk [vmem:[#allocation2 + $0x1d8] sm:$0x1] %vm618, 0.0
      %658 = vst.msk [vmem:[#allocation2 + $0x1f8] sm:$0x1] %vm618, 0.0
      %659 = vst.msk [vmem:[#allocation2 + $0x218] sm:$0x1] %vm618, 0.0
      %660 = vst.msk [vmem:[#allocation2 + $0x238] sm:$0x1] %vm618, 0.0
      %s661 = scalar_lea.vmem [#allocation2], 32
      %662 = vst.msk [vmem:[%s661 + $0x8] sm:$0xff] %vm614, %v582
      %663 = vst.msk [vmem:[%s661 + $0x10] sm:$0xff] %vm614, %v583
      %664 = vst.msk [vmem:[%s661 + $0x28] sm:$0xff] %vm614, %v584
      %665 = vst.msk [vmem:[%s661 + $0x30] sm:$0xff] %vm614, %v585
      %666 = vst.msk [vmem:[%s661 + $0x48] sm:$0xff] %vm614, %v586
      %667 = vst.msk [vmem:[%s661 + $0x50] sm:$0xff] %vm614, %v587
      %668 = vst.msk [vmem:[%s661 + $0x68] sm:$0xff] %vm614, %v588
      %669 = vst.msk [vmem:[%s661 + $0x70] sm:$0xff] %vm614, %v589
      %670 = vst.msk [vmem:[%s661 + $0x88] sm:$0xff] %vm614, %v590
      %671 = vst.msk [vmem:[%s661 + $0x90] sm:$0xff] %vm614, %v591
      %672 = vst.msk [vmem:[%s661 + $0xa8] sm:$0xff] %vm614, %v592
      %673 = vst.msk [vmem:[%s661 + $0xb0] sm:$0xff] %vm614, %v593
      %674 = vst.msk [vmem:[%s661 + $0xc8] sm:$0xff] %vm614, %v594
      %675 = vst.msk [vmem:[%s661 + $0xd0] sm:$0xff] %vm614, %v595
      %676 = vst.msk [vmem:[%s661 + $0xe8] sm:$0xff] %vm614, %v596
      %677 = vst.msk [vmem:[%s661 + $0xf0] sm:$0xff] %vm614, %v597
      %678 = vst.msk [vmem:[%s661 + $0x108] sm:$0xff] %vm614, %v598
      %679 = vst.msk [vmem:[%s661 + $0x110] sm:$0xff] %vm614, %v599
      %680 = vst.msk [vmem:[%s661 + $0x128] sm:$0xff] %vm614, %v600
      %681 = vst.msk [vmem:[%s661 + $0x130] sm:$0xff] %vm614, %v601
      %682 = vst.msk [vmem:[%s661 + $0x148] sm:$0xff] %vm614, %v602
      %683 = vst.msk [vmem:[%s661 + $0x150] sm:$0xff] %vm614, %v603
      %684 = vst.msk [vmem:[%s661 + $0x168] sm:$0xff] %vm614, %v604
      %685 = vst.msk [vmem:[%s661 + $0x170] sm:$0xff] %vm614, %v605
      %686 = vst.msk [vmem:[%s661 + $0x188] sm:$0xff] %vm614, %v606
      %687 = vst.msk [vmem:[%s661 + $0x190] sm:$0xff] %vm614, %v607
      %688 = vst.msk [vmem:[%s661 + $0x1a8] sm:$0xff] %vm614, %v608
      %689 = vst.msk [vmem:[%s661 + $0x1b0] sm:$0xff] %vm614, %v609
      %690 = vst.msk [vmem:[%s661 + $0x1c8] sm:$0xff] %vm614, %v610
      %691 = vst.msk [vmem:[%s661 + $0x1d0] sm:$0xff] %vm614, %v611
      %692 = vst.msk [vmem:[%s661 + $0x1e8] sm:$0xff] %vm614, %v612
      %693 = vst.msk [vmem:[%s661 + $0x1f0] sm:$0xff] %vm614, %v613
      %v694 = vld [vmem:[%s3] sm:$0x7]
      %v695 = vld [vmem:[%s3 + $0x4] sm:$0x7]
      %v696 = vld [vmem:[%s3 + $0x8] sm:$0x7]
      %v697 = vld [vmem:[%s4] sm:$0x1]
      %v698 = vld [vmem:[#allocation2 + $0x7] sm:$0xff]
      %v699 = vld [vmem:[#allocation2 + $0xf] sm:$0xff]
      %v700 = vld [vmem:[#allocation2 + $0x27] sm:$0xff]
      %v701 = vld [vmem:[#allocation2 + $0x2f] sm:$0xff]
      %v702 = vld [vmem:[#allocation2 + $0x47] sm:$0xff]
      %v703 = vld [vmem:[#allocation2 + $0x4f] sm:$0xff]
      %v704 = vld [vmem:[#allocation2 + $0x67] sm:$0xff]
      %v705 = vld [vmem:[#allocation2 + $0x6f] sm:$0xff]
      %v706 = vld [vmem:[#allocation2 + $0x87] sm:$0xff]
      %v707 = vld [vmem:[#allocation2 + $0x8f] sm:$0xff]
      %v708 = vld [vmem:[#allocation2 + $0xa7] sm:$0xff]
      %v709 = vld [vmem:[#allocation2 + $0xaf] sm:$0xff]
      %v710 = vld [vmem:[#allocation2 + $0xc7] sm:$0xff]
      %v711 = vld [vmem:[#allocation2 + $0xcf] sm:$0xff]
      %v712 = vld [vmem:[#allocation2 + $0xe7] sm:$0xff]
      %v713 = vld [vmem:[#allocation2 + $0xef] sm:$0xff]
      %v714 = vld [vmem:[#allocation2 + $0x107] sm:$0xff]
      %v715 = vld [vmem:[#allocation2 + $0x10f] sm:$0xff]
      %v716 = vld [vmem:[#allocation2 + $0x127] sm:$0xff]
      %v717 = vld [vmem:[#allocation2 + $0x12f] sm:$0xff]
      %v718 = vld [vmem:[#allocation2 + $0x147] sm:$0xff]
      %v719 = vld [vmem:[#allocation2 + $0x14f] sm:$0xff]
      %v720 = vld [vmem:[#allocation2 + $0x167] sm:$0xff]
      %v721 = vld [vmem:[#allocation2 + $0x16f] sm:$0xff]
      %v722 = vld [vmem:[#allocation2 + $0x187] sm:$0xff]
      %v723 = vld [vmem:[#allocation2 + $0x18f] sm:$0xff]
      %v724 = vld [vmem:[#allocation2 + $0x1a7] sm:$0xff]
      %v725 = vld [vmem:[#allocation2 + $0x1af] sm:$0xff]
      %v726 = vld [vmem:[#allocation2 + $0x1c7] sm:$0xff]
      %v727 = vld [vmem:[#allocation2 + $0x1cf] sm:$0xff]
      %v728 = vld [vmem:[#allocation2 + $0x1e7] sm:$0xff]
      %v729 = vld [vmem:[#allocation2 + $0x1ef] sm:$0xff]
      %v730 = vld [vmem:[#allocation2 + $0x207] sm:$0xff]
      %v731 = vld [vmem:[#allocation2 + $0x20f] sm:$0xff]
      %v732 = vld [vmem:[#allocation2 + $0x227] sm:$0xff]
      %v733 = vld [vmem:[#allocation2 + $0x22f] sm:$0xff]
      %v734 = vlaneseq
      %v735 = vshrl.u32 %v734, 7
      %v736 = vsub.s32 0, %v735
      %v737 = vrot.slane %v694, %v736
      %v738 = vmul.f32 %v698, %v737
      %v739 = vmul.f32 %v699, %v737
      %v740 = vmul.f32 %v700, %v737
      %v741 = vmul.f32 %v701, %v737
      %v742 = vmul.f32 %v702, %v737
      %v743 = vmul.f32 %v703, %v737
      %v744 = vmul.f32 %v704, %v737
      %v745 = vmul.f32 %v705, %v737
      %v746 = vmul.f32 %v706, %v737
      %v747 = vmul.f32 %v707, %v737
      %v748 = vmul.f32 %v708, %v737
      %v749 = vmul.f32 %v709, %v737
      %v750 = vmul.f32 %v710, %v737
      %v751 = vmul.f32 %v711, %v737
      %v752 = vmul.f32 %v712, %v737
      %v753 = vmul.f32 %v713, %v737
      %v754 = vmul.f32 %v714, %v737
      %v755 = vmul.f32 %v715, %v737
      %v756 = vmul.f32 %v716, %v737
      %v757 = vmul.f32 %v717, %v737
      %v758 = vmul.f32 %v718, %v737
      %v759 = vmul.f32 %v719, %v737
      %v760 = vmul.f32 %v720, %v737
      %v761 = vmul.f32 %v721, %v737
      %v762 = vmul.f32 %v722, %v737
      %v763 = vmul.f32 %v723, %v737
      %v764 = vmul.f32 %v724, %v737
      %v765 = vmul.f32 %v725, %v737
      %v766 = vmul.f32 %v726, %v737
      %v767 = vmul.f32 %v727, %v737
      %v768 = vmul.f32 %v728, %v737
      %v769 = vmul.f32 %v729, %v737
      %v771 = vlaneseq
      %v772 = vshrl.u32 %v771, 7
      %v773 = vsub.s32 0, %v772
      %v774 = vrot.slane %v697, %v773
      %v776 = vadd.f32 %v738, %v774
      %v777 = vadd.f32 %v739, %v774
      %v778 = vadd.f32 %v740, %v774
      %v779 = vadd.f32 %v741, %v774
      %v780 = vadd.f32 %v742, %v774
      %v781 = vadd.f32 %v743, %v774
      %v782 = vadd.f32 %v744, %v774
      %v783 = vadd.f32 %v745, %v774
      %v784 = vadd.f32 %v746, %v774
      %v785 = vadd.f32 %v747, %v774
      %v786 = vadd.f32 %v748, %v774
      %v787 = vadd.f32 %v749, %v774
      %v788 = vadd.f32 %v750, %v774
      %v789 = vadd.f32 %v751, %v774
      %v790 = vadd.f32 %v752, %v774
      %v791 = vadd.f32 %v753, %v774
      %v792 = vadd.f32 %v754, %v774
      %v793 = vadd.f32 %v755, %v774
      %v794 = vadd.f32 %v756, %v774
      %v795 = vadd.f32 %v757, %v774
      %v796 = vadd.f32 %v758, %v774
      %v797 = vadd.f32 %v759, %v774
      %v798 = vadd.f32 %v760, %v774
      %v799 = vadd.f32 %v761, %v774
      %v800 = vadd.f32 %v762, %v774
      %v801 = vadd.f32 %v763, %v774
      %v802 = vadd.f32 %v764, %v774
      %v803 = vadd.f32 %v765, %v774
      %v804 = vadd.f32 %v766, %v774
      %v805 = vadd.f32 %v767, %v774
      %v806 = vadd.f32 %v768, %v774
      %v807 = vadd.f32 %v769, %v774
      %v808 = vlaneseq
      %v809 = vshrl.u32 %v808, 7
      %v810 = vsub.s32 0, %v809
      %v811 = vrot.slane %v695, %v810
      %v812 = vmul.f32 %v700, %v811
      %v813 = vmul.f32 %v701, %v811
      %v814 = vmul.f32 %v702, %v811
      %v815 = vmul.f32 %v703, %v811
      %v816 = vmul.f32 %v704, %v811
      %v817 = vmul.f32 %v705, %v811
      %v818 = vmul.f32 %v706, %v811
      %v819 = vmul.f32 %v707, %v811
      %v820 = vmul.f32 %v708, %v811
      %v821 = vmul.f32 %v709, %v811
      %v822 = vmul.f32 %v710, %v811
      %v823 = vmul.f32 %v711, %v811
      %v824 = vmul.f32 %v712, %v811
      %v825 = vmul.f32 %v713, %v811
      %v826 = vmul.f32 %v714, %v811
      %v827 = vmul.f32 %v715, %v811
      %v828 = vmul.f32 %v716, %v811
      %v829 = vmul.f32 %v717, %v811
      %v830 = vmul.f32 %v718, %v811
      %v831 = vmul.f32 %v719, %v811
      %v832 = vmul.f32 %v720, %v811
      %v833 = vmul.f32 %v721, %v811
      %v834 = vmul.f32 %v722, %v811
      %v835 = vmul.f32 %v723, %v811
      %v836 = vmul.f32 %v724, %v811
      %v837 = vmul.f32 %v725, %v811
      %v838 = vmul.f32 %v726, %v811
      %v839 = vmul.f32 %v727, %v811
      %v840 = vmul.f32 %v728, %v811
      %v841 = vmul.f32 %v729, %v811
      %v842 = vmul.f32 %v730, %v811
      %v843 = vmul.f32 %v731, %v811
      %v844 = vadd.f32 %v776, %v812
      %v845 = vadd.f32 %v777, %v813
      %v846 = vadd.f32 %v778, %v814
      %v847 = vadd.f32 %v779, %v815
      %v848 = vadd.f32 %v780, %v816
      %v849 = vadd.f32 %v781, %v817
      %v850 = vadd.f32 %v782, %v818
      %v851 = vadd.f32 %v783, %v819
      %v852 = vadd.f32 %v784, %v820
      %v853 = vadd.f32 %v785, %v821
      %v854 = vadd.f32 %v786, %v822
      %v855 = vadd.f32 %v787, %v823
      %v856 = vadd.f32 %v788, %v824
      %v857 = vadd.f32 %v789, %v825
      %v858 = vadd.f32 %v790, %v826
      %v859 = vadd.f32 %v791, %v827
      %v860 = vadd.f32 %v792, %v828
      %v861 = vadd.f32 %v793, %v829
      %v862 = vadd.f32 %v794, %v830
      %v863 = vadd.f32 %v795, %v831
      %v864 = vadd.f32 %v796, %v832
      %v865 = vadd.f32 %v797, %v833
      %v866 = vadd.f32 %v798, %v834
      %v867 = vadd.f32 %v799, %v835
      %v868 = vadd.f32 %v800, %v836
      %v869 = vadd.f32 %v801, %v837
      %v870 = vadd.f32 %v802, %v838
      %v871 = vadd.f32 %v803, %v839
      %v872 = vadd.f32 %v804, %v840
      %v873 = vadd.f32 %v805, %v841
      %v874 = vadd.f32 %v806, %v842
      %v875 = vadd.f32 %v807, %v843
      %v876 = vlaneseq
      %v877 = vshrl.u32 %v876, 7
      %v878 = vsub.s32 0, %v877
      %v879 = vrot.slane %v696, %v878
      %v880 = vmul.f32 %v702, %v879
      %v881 = vmul.f32 %v703, %v879
      %v882 = vmul.f32 %v704, %v879
      %v883 = vmul.f32 %v705, %v879
      %v884 = vmul.f32 %v706, %v879
      %v885 = vmul.f32 %v707, %v879
      %v886 = vmul.f32 %v708, %v879
      %v887 = vmul.f32 %v709, %v879
      %v888 = vmul.f32 %v710, %v879
      %v889 = vmul.f32 %v711, %v879
      %v890 = vmul.f32 %v712, %v879
      %v891 = vmul.f32 %v713, %v879
      %v892 = vmul.f32 %v714, %v879
      %v893 = vmul.f32 %v715, %v879
      %v894 = vmul.f32 %v716, %v879
      %v895 = vmul.f32 %v717, %v879
      %v896 = vmul.f32 %v718, %v879
      %v897 = vmul.f32 %v719, %v879
      %v898 = vmul.f32 %v720, %v879
      %v899 = vmul.f32 %v721, %v879
      %v900 = vmul.f32 %v722, %v879
      %v901 = vmul.f32 %v723, %v879
      %v902 = vmul.f32 %v724, %v879
      %v903 = vmul.f32 %v725, %v879
      %v904 = vmul.f32 %v726, %v879
      %v905 = vmul.f32 %v727, %v879
      %v906 = vmul.f32 %v728, %v879
      %v907 = vmul.f32 %v729, %v879
      %v908 = vmul.f32 %v730, %v879
      %v909 = vmul.f32 %v731, %v879
      %v910 = vmul.f32 %v732, %v879
      %v911 = vmul.f32 %v733, %v879
      %v912 = vadd.f32 %v844, %v880
      %v913 = vadd.f32 %v845, %v881
      %v914 = vadd.f32 %v846, %v882
      %v915 = vadd.f32 %v847, %v883
      %v916 = vadd.f32 %v848, %v884
      %v917 = vadd.f32 %v849, %v885
      %v918 = vadd.f32 %v850, %v886
      %v919 = vadd.f32 %v851, %v887
      %v920 = vadd.f32 %v852, %v888
      %v921 = vadd.f32 %v853, %v889
      %v922 = vadd.f32 %v854, %v890
      %v923 = vadd.f32 %v855, %v891
      %v924 = vadd.f32 %v856, %v892
      %v925 = vadd.f32 %v857, %v893
      %v926 = vadd.f32 %v858, %v894
      %v927 = vadd.f32 %v859, %v895
      %v928 = vadd.f32 %v860, %v896
      %v929 = vadd.f32 %v861, %v897
      %v930 = vadd.f32 %v862, %v898
      %v931 = vadd.f32 %v863, %v899
      %v932 = vadd.f32 %v864, %v900
      %v933 = vadd.f32 %v865, %v901
      %v934 = vadd.f32 %v866, %v902
      %v935 = vadd.f32 %v867, %v903
      %v936 = vadd.f32 %v868, %v904
      %v937 = vadd.f32 %v869, %v905
      %v938 = vadd.f32 %v870, %v906
      %v939 = vadd.f32 %v871, %v907
      %v940 = vadd.f32 %v872, %v908
      %v941 = vadd.f32 %v873, %v909
      %v942 = vadd.f32 %v874, %v910
      %v943 = vadd.f32 %v875, %v911
      %v944 = vld [vmem:[#allocation2 + $0x8] sm:$0xff]
      %v945 = vld [vmem:[#allocation2 + $0x10] sm:$0xff]
      %v946 = vld [vmem:[#allocation2 + $0x28] sm:$0xff]
      %v947 = vld [vmem:[#allocation2 + $0x30] sm:$0xff]
      %v948 = vld [vmem:[#allocation2 + $0x48] sm:$0xff]
      %v949 = vld [vmem:[#allocation2 + $0x50] sm:$0xff]
      %v950 = vld [vmem:[#allocation2 + $0x68] sm:$0xff]
      %v951 = vld [vmem:[#allocation2 + $0x70] sm:$0xff]
      %v952 = vld [vmem:[#allocation2 + $0x88] sm:$0xff]
      %v953 = vld [vmem:[#allocation2 + $0x90] sm:$0xff]
      %v954 = vld [vmem:[#allocation2 + $0xa8] sm:$0xff]
      %v955 = vld [vmem:[#allocation2 + $0xb0] sm:$0xff]
      %v956 = vld [vmem:[#allocation2 + $0xc8] sm:$0xff]
      %v957 = vld [vmem:[#allocation2 + $0xd0] sm:$0xff]
      %v958 = vld [vmem:[#allocation2 + $0xe8] sm:$0xff]
      %v959 = vld [vmem:[#allocation2 + $0xf0] sm:$0xff]
      %v960 = vld [vmem:[#allocation2 + $0x108] sm:$0xff]
      %v961 = vld [vmem:[#allocation2 + $0x110] sm:$0xff]
      %v962 = vld [vmem:[#allocation2 + $0x128] sm:$0xff]
      %v963 = vld [vmem:[#allocation2 + $0x130] sm:$0xff]
      %v964 = vld [vmem:[#allocation2 + $0x148] sm:$0xff]
      %v965 = vld [vmem:[#allocation2 + $0x150] sm:$0xff]
      %v966 = vld [vmem:[#allocation2 + $0x168] sm:$0xff]
      %v967 = vld [vmem:[#allocation2 + $0x170] sm:$0xff]
      %v968 = vld [vmem:[#allocation2 + $0x188] sm:$0xff]
      %v969 = vld [vmem:[#allocation2 + $0x190] sm:$0xff]
      %v970 = vld [vmem:[#allocation2 + $0x1a8] sm:$0xff]
      %v971 = vld [vmem:[#allocation2 + $0x1b0] sm:$0xff]
      %v972 = vld [vmem:[#allocation2 + $0x1c8] sm:$0xff]
      %v973 = vld [vmem:[#allocation2 + $0x1d0] sm:$0xff]
      %v974 = vld [vmem:[#allocation2 + $0x1e8] sm:$0xff]
      %v975 = vld [vmem:[#allocation2 + $0x1f0] sm:$0xff]
      %v976 = vld [vmem:[#allocation2 + $0x208] sm:$0xff]
      %v977 = vld [vmem:[#allocation2 + $0x210] sm:$0xff]
      %v978 = vld [vmem:[#allocation2 + $0x228] sm:$0xff]
      %v979 = vld [vmem:[#allocation2 + $0x230] sm:$0xff]
      %v980 = vlaneseq
      %v981 = vshrl.u32 %v980, 7
      %v982 = vsub.s32 1, %v981
      %v983 = vrot.slane %v694, %v982
      %v984 = vmul.f32 %v944, %v983
      %v985 = vmul.f32 %v945, %v983
      %v986 = vmul.f32 %v946, %v983
      %v987 = vmul.f32 %v947, %v983
      %v988 = vmul.f32 %v948, %v983
      %v989 = vmul.f32 %v949, %v983
      %v990 = vmul.f32 %v950, %v983
      %v991 = vmul.f32 %v951, %v983
      %v992 = vmul.f32 %v952, %v983
      %v993 = vmul.f32 %v953, %v983
      %v994 = vmul.f32 %v954, %v983
      %v995 = vmul.f32 %v955, %v983
      %v996 = vmul.f32 %v956, %v983
      %v997 = vmul.f32 %v957, %v983
      %v998 = vmul.f32 %v958, %v983
      %v999 = vmul.f32 %v959, %v983
      %v1000 = vmul.f32 %v960, %v983
      %v1001 = vmul.f32 %v961, %v983
      %v1002 = vmul.f32 %v962, %v983
      %v1003 = vmul.f32 %v963, %v983
      %v1004 = vmul.f32 %v964, %v983
      %v1005 = vmul.f32 %v965, %v983
      %v1006 = vmul.f32 %v966, %v983
      %v1007 = vmul.f32 %v967, %v983
      %v1008 = vmul.f32 %v968, %v983
      %v1009 = vmul.f32 %v969, %v983
      %v1010 = vmul.f32 %v970, %v983
      %v1011 = vmul.f32 %v971, %v983
      %v1012 = vmul.f32 %v972, %v983
      %v1013 = vmul.f32 %v973, %v983
      %v1014 = vmul.f32 %v974, %v983
      %v1015 = vmul.f32 %v975, %v983
      %v1016 = vadd.f32 %v912, %v984
      %v1017 = vadd.f32 %v913, %v985
      %v1018 = vadd.f32 %v914, %v986
      %v1019 = vadd.f32 %v915, %v987
      %v1020 = vadd.f32 %v916, %v988
      %v1021 = vadd.f32 %v917, %v989
      %v1022 = vadd.f32 %v918, %v990
      %v1023 = vadd.f32 %v919, %v991
      %v1024 = vadd.f32 %v920, %v992
      %v1025 = vadd.f32 %v921, %v993
      %v1026 = vadd.f32 %v922, %v994
      %v1027 = vadd.f32 %v923, %v995
      %v1028 = vadd.f32 %v924, %v996
      %v1029 = vadd.f32 %v925, %v997
      %v1030 = vadd.f32 %v926, %v998
      %v1031 = vadd.f32 %v927, %v999
      %v1032 = vadd.f32 %v928, %v1000
      %v1033 = vadd.f32 %v929, %v1001
      %v1034 = vadd.f32 %v930, %v1002
      %v1035 = vadd.f32 %v931, %v1003
      %v1036 = vadd.f32 %v932, %v1004
      %v1037 = vadd.f32 %v933, %v1005
      %v1038 = vadd.f32 %v934, %v1006
      %v1039 = vadd.f32 %v935, %v1007
      %v1040 = vadd.f32 %v936, %v1008
      %v1041 = vadd.f32 %v937, %v1009
      %v1042 = vadd.f32 %v938, %v1010
      %v1043 = vadd.f32 %v939, %v1011
      %v1044 = vadd.f32 %v940, %v1012
      %v1045 = vadd.f32 %v941, %v1013
      %v1046 = vadd.f32 %v942, %v1014
      %v1047 = vadd.f32 %v943, %v1015
      %v1048 = vlaneseq
      %v1049 = vshrl.u32 %v1048, 7
      %v1050 = vsub.s32 1, %v1049
      %v1051 = vrot.slane %v695, %v1050
      %v1052 = vmul.f32 %v946, %v1051
      %v1053 = vmul.f32 %v947, %v1051
      %v1054 = vmul.f32 %v948, %v1051
      %v1055 = vmul.f32 %v949, %v1051
      %v1056 = vmul.f32 %v950, %v1051
      %v1057 = vmul.f32 %v951, %v1051
      %v1058 = vmul.f32 %v952, %v1051
      %v1059 = vmul.f32 %v953, %v1051
      %v1060 = vmul.f32 %v954, %v1051
      %v1061 = vmul.f32 %v955, %v1051
      %v1062 = vmul.f32 %v956, %v1051
      %v1063 = vmul.f32 %v957, %v1051
      %v1064 = vmul.f32 %v958, %v1051
      %v1065 = vmul.f32 %v959, %v1051
      %v1066 = vmul.f32 %v960, %v1051
      %v1067 = vmul.f32 %v961, %v1051
      %v1068 = vmul.f32 %v962, %v1051
      %v1069 = vmul.f32 %v963, %v1051
      %v1070 = vmul.f32 %v964, %v1051
      %v1071 = vmul.f32 %v965, %v1051
      %v1072 = vmul.f32 %v966, %v1051
      %v1073 = vmul.f32 %v967, %v1051
      %v1074 = vmul.f32 %v968, %v1051
      %v1075 = vmul.f32 %v969, %v1051
      %v1076 = vmul.f32 %v970, %v1051
      %v1077 = vmul.f32 %v971, %v1051
      %v1078 = vmul.f32 %v972, %v1051
      %v1079 = vmul.f32 %v973, %v1051
      %v1080 = vmul.f32 %v974, %v1051
      %v1081 = vmul.f32 %v975, %v1051
      %v1082 = vmul.f32 %v976, %v1051
      %v1083 = vmul.f32 %v977, %v1051
      %v1084 = vadd.f32 %v1016, %v1052
      %v1085 = vadd.f32 %v1017, %v1053
      %v1086 = vadd.f32 %v1018, %v1054
      %v1087 = vadd.f32 %v1019, %v1055
      %v1088 = vadd.f32 %v1020, %v1056
      %v1089 = vadd.f32 %v1021, %v1057
      %v1090 = vadd.f32 %v1022, %v1058
      %v1091 = vadd.f32 %v1023, %v1059
      %v1092 = vadd.f32 %v1024, %v1060
      %v1093 = vadd.f32 %v1025, %v1061
      %v1094 = vadd.f32 %v1026, %v1062
      %v1095 = vadd.f32 %v1027, %v1063
      %v1096 = vadd.f32 %v1028, %v1064
      %v1097 = vadd.f32 %v1029, %v1065
      %v1098 = vadd.f32 %v1030, %v1066
      %v1099 = vadd.f32 %v1031, %v1067
      %v1100 = vadd.f32 %v1032, %v1068
      %v1101 = vadd.f32 %v1033, %v1069
      %v1102 = vadd.f32 %v1034, %v1070
      %v1103 = vadd.f32 %v1035, %v1071
      %v1104 = vadd.f32 %v1036, %v1072
      %v1105 = vadd.f32 %v1037, %v1073
      %v1106 = vadd.f32 %v1038, %v1074
      %v1107 = vadd.f32 %v1039, %v1075
      %v1108 = vadd.f32 %v1040, %v1076
      %v1109 = vadd.f32 %v1041, %v1077
      %v1110 = vadd.f32 %v1042, %v1078
      %v1111 = vadd.f32 %v1043, %v1079
      %v1112 = vadd.f32 %v1044, %v1080
      %v1113 = vadd.f32 %v1045, %v1081
      %v1114 = vadd.f32 %v1046, %v1082
      %v1115 = vadd.f32 %v1047, %v1083
      %v1116 = vlaneseq
      %v1117 = vshrl.u32 %v1116, 7
      %v1118 = vsub.s32 1, %v1117
      %v1119 = vrot.slane %v696, %v1118
      %v1120 = vmul.f32 %v948, %v1119
      %v1121 = vmul.f32 %v949, %v1119
      %v1122 = vmul.f32 %v950, %v1119
      %v1123 = vmul.f32 %v951, %v1119
      %v1124 = vmul.f32 %v952, %v1119
      %v1125 = vmul.f32 %v953, %v1119
      %v1126 = vmul.f32 %v954, %v1119
      %v1127 = vmul.f32 %v955, %v1119
      %v1128 = vmul.f32 %v956, %v1119
      %v1129 = vmul.f32 %v957, %v1119
      %v1130 = vmul.f32 %v958, %v1119
      %v1131 = vmul.f32 %v959, %v1119
      %v1132 = vmul.f32 %v960, %v1119
      %v1133 = vmul.f32 %v961, %v1119
      %v1134 = vmul.f32 %v962, %v1119
      %v1135 = vmul.f32 %v963, %v1119
      %v1136 = vmul.f32 %v964, %v1119
      %v1137 = vmul.f32 %v965, %v1119
      %v1138 = vmul.f32 %v966, %v1119
      %v1139 = vmul.f32 %v967, %v1119
      %v1140 = vmul.f32 %v968, %v1119
      %v1141 = vmul.f32 %v969, %v1119
      %v1142 = vmul.f32 %v970, %v1119
      %v1143 = vmul.f32 %v971, %v1119
      %v1144 = vmul.f32 %v972, %v1119
      %v1145 = vmul.f32 %v973, %v1119
      %v1146 = vmul.f32 %v974, %v1119
      %v1147 = vmul.f32 %v975, %v1119
      %v1148 = vmul.f32 %v976, %v1119
      %v1149 = vmul.f32 %v977, %v1119
      %v1150 = vmul.f32 %v978, %v1119
      %v1151 = vmul.f32 %v979, %v1119
      %v1152 = vadd.f32 %v1084, %v1120
      %v1153 = vadd.f32 %v1085, %v1121
      %v1154 = vadd.f32 %v1086, %v1122
      %v1155 = vadd.f32 %v1087, %v1123
      %v1156 = vadd.f32 %v1088, %v1124
      %v1157 = vadd.f32 %v1089, %v1125
      %v1158 = vadd.f32 %v1090, %v1126
      %v1159 = vadd.f32 %v1091, %v1127
      %v1160 = vadd.f32 %v1092, %v1128
      %v1161 = vadd.f32 %v1093, %v1129
      %v1162 = vadd.f32 %v1094, %v1130
      %v1163 = vadd.f32 %v1095, %v1131
      %v1164 = vadd.f32 %v1096, %v1132
      %v1165 = vadd.f32 %v1097, %v1133
      %v1166 = vadd.f32 %v1098, %v1134
      %v1167 = vadd.f32 %v1099, %v1135
      %v1168 = vadd.f32 %v1100, %v1136
      %v1169 = vadd.f32 %v1101, %v1137
      %v1170 = vadd.f32 %v1102, %v1138
      %v1171 = vadd.f32 %v1103, %v1139
      %v1172 = vadd.f32 %v1104, %v1140
      %v1173 = vadd.f32 %v1105, %v1141
      %v1174 = vadd.f32 %v1106, %v1142
      %v1175 = vadd.f32 %v1107, %v1143
      %v1176 = vadd.f32 %v1108, %v1144
      %v1177 = vadd.f32 %v1109, %v1145
      %v1178 = vadd.f32 %v1110, %v1146
      %v1179 = vadd.f32 %v1111, %v1147
      %v1180 = vadd.f32 %v1112, %v1148
      %v1181 = vadd.f32 %v1113, %v1149
      %v1182 = vadd.f32 %v1114, %v1150
      %v1183 = vadd.f32 %v1115, %v1151
      %v1184 = vld [vmem:[#allocation2 + $0x9] sm:$0xff]
      %v1185 = vld [vmem:[#allocation2 + $0x11] sm:$0xff]
      %v1186 = vld [vmem:[#allocation2 + $0x29] sm:$0xff]
      %v1187 = vld [vmem:[#allocation2 + $0x31] sm:$0xff]
      %v1188 = vld [vmem:[#allocation2 + $0x49] sm:$0xff]
      %v1189 = vld [vmem:[#allocation2 + $0x51] sm:$0xff]
      %v1190 = vld [vmem:[#allocation2 + $0x69] sm:$0xff]
      %v1191 = vld [vmem:[#allocation2 + $0x71] sm:$0xff]
      %v1192 = vld [vmem:[#allocation2 + $0x89] sm:$0xff]
      %v1193 = vld [vmem:[#allocation2 + $0x91] sm:$0xff]
      %v1194 = vld [vmem:[#allocation2 + $0xa9] sm:$0xff]
      %v1195 = vld [vmem:[#allocation2 + $0xb1] sm:$0xff]
      %v1196 = vld [vmem:[#allocation2 + $0xc9] sm:$0xff]
      %v1197 = vld [vmem:[#allocation2 + $0xd1] sm:$0xff]
      %v1198 = vld [vmem:[#allocation2 + $0xe9] sm:$0xff]
      %v1199 = vld [vmem:[#allocation2 + $0xf1] sm:$0xff]
      %v1200 = vld [vmem:[#allocation2 + $0x109] sm:$0xff]
      %v1201 = vld [vmem:[#allocation2 + $0x111] sm:$0xff]
      %v1202 = vld [vmem:[#allocation2 + $0x129] sm:$0xff]
      %v1203 = vld [vmem:[#allocation2 + $0x131] sm:$0xff]
      %v1204 = vld [vmem:[#allocation2 + $0x149] sm:$0xff]
      %v1205 = vld [vmem:[#allocation2 + $0x151] sm:$0xff]
      %v1206 = vld [vmem:[#allocation2 + $0x169] sm:$0xff]
      %v1207 = vld [vmem:[#allocation2 + $0x171] sm:$0xff]
      %v1208 = vld [vmem:[#allocation2 + $0x189] sm:$0xff]
      %v1209 = vld [vmem:[#allocation2 + $0x191] sm:$0xff]
      %v1210 = vld [vmem:[#allocation2 + $0x1a9] sm:$0xff]
      %v1211 = vld [vmem:[#allocation2 + $0x1b1] sm:$0xff]
      %v1212 = vld [vmem:[#allocation2 + $0x1c9] sm:$0xff]
      %v1213 = vld [vmem:[#allocation2 + $0x1d1] sm:$0xff]
      %v1214 = vld [vmem:[#allocation2 + $0x1e9] sm:$0xff]
      %v1215 = vld [vmem:[#allocation2 + $0x1f1] sm:$0xff]
      %v1216 = vld [vmem:[#allocation2 + $0x209] sm:$0xff]
      %v1217 = vld [vmem:[#allocation2 + $0x211] sm:$0xff]
      %v1218 = vld [vmem:[#allocation2 + $0x229] sm:$0xff]
      %v1219 = vld [vmem:[#allocation2 + $0x231] sm:$0xff]
      %v1220 = vlaneseq
      %v1221 = vshrl.u32 %v1220, 7
      %v1222 = vsub.s32 2, %v1221
      %v1223 = vrot.slane %v694, %v1222
      %v1224 = vmul.f32 %v1184, %v1223
      %v1225 = vmul.f32 %v1185, %v1223
      %v1226 = vmul.f32 %v1186, %v1223
      %v1227 = vmul.f32 %v1187, %v1223
      %v1228 = vmul.f32 %v1188, %v1223
      %v1229 = vmul.f32 %v1189, %v1223
      %v1230 = vmul.f32 %v1190, %v1223
      %v1231 = vmul.f32 %v1191, %v1223
      %v1232 = vmul.f32 %v1192, %v1223
      %v1233 = vmul.f32 %v1193, %v1223
      %v1234 = vmul.f32 %v1194, %v1223
      %v1235 = vmul.f32 %v1195, %v1223
      %v1236 = vmul.f32 %v1196, %v1223
      %v1237 = vmul.f32 %v1197, %v1223
      %v1238 = vmul.f32 %v1198, %v1223
      %v1239 = vmul.f32 %v1199, %v1223
      %v1240 = vmul.f32 %v1200, %v1223
      %v1241 = vmul.f32 %v1201, %v1223
      %v1242 = vmul.f32 %v1202, %v1223
      %v1243 = vmul.f32 %v1203, %v1223
      %v1244 = vmul.f32 %v1204, %v1223
      %v1245 = vmul.f32 %v1205, %v1223
      %v1246 = vmul.f32 %v1206, %v1223
      %v1247 = vmul.f32 %v1207, %v1223
      %v1248 = vmul.f32 %v1208, %v1223
      %v1249 = vmul.f32 %v1209, %v1223
      %v1250 = vmul.f32 %v1210, %v1223
      %v1251 = vmul.f32 %v1211, %v1223
      %v1252 = vmul.f32 %v1212, %v1223
      %v1253 = vmul.f32 %v1213, %v1223
      %v1254 = vmul.f32 %v1214, %v1223
      %v1255 = vmul.f32 %v1215, %v1223
      %v1256 = vadd.f32 %v1152, %v1224
      %v1257 = vadd.f32 %v1153, %v1225
      %v1258 = vadd.f32 %v1154, %v1226
      %v1259 = vadd.f32 %v1155, %v1227
      %v1260 = vadd.f32 %v1156, %v1228
      %v1261 = vadd.f32 %v1157, %v1229
      %v1262 = vadd.f32 %v1158, %v1230
      %v1263 = vadd.f32 %v1159, %v1231
      %v1264 = vadd.f32 %v1160, %v1232
      %v1265 = vadd.f32 %v1161, %v1233
      %v1266 = vadd.f32 %v1162, %v1234
      %v1267 = vadd.f32 %v1163, %v1235
      %v1268 = vadd.f32 %v1164, %v1236
      %v1269 = vadd.f32 %v1165, %v1237
      %v1270 = vadd.f32 %v1166, %v1238
      %v1271 = vadd.f32 %v1167, %v1239
      %v1272 = vadd.f32 %v1168, %v1240
      %v1273 = vadd.f32 %v1169, %v1241
      %v1274 = vadd.f32 %v1170, %v1242
      %v1275 = vadd.f32 %v1171, %v1243
      %v1276 = vadd.f32 %v1172, %v1244
      %v1277 = vadd.f32 %v1173, %v1245
      %v1278 = vadd.f32 %v1174, %v1246
      %v1279 = vadd.f32 %v1175, %v1247
      %v1280 = vadd.f32 %v1176, %v1248
      %v1281 = vadd.f32 %v1177, %v1249
      %v1282 = vadd.f32 %v1178, %v1250
      %v1283 = vadd.f32 %v1179, %v1251
      %v1284 = vadd.f32 %v1180, %v1252
      %v1285 = vadd.f32 %v1181, %v1253
      %v1286 = vadd.f32 %v1182, %v1254
      %v1287 = vadd.f32 %v1183, %v1255
      %v1288 = vlaneseq
      %v1289 = vshrl.u32 %v1288, 7
      %v1290 = vsub.s32 2, %v1289
      %v1291 = vrot.slane %v695, %v1290
      %v1292 = vmul.f32 %v1186, %v1291
      %v1293 = vmul.f32 %v1187, %v1291
      %v1294 = vmul.f32 %v1188, %v1291
      %v1295 = vmul.f32 %v1189, %v1291
      %v1296 = vmul.f32 %v1190, %v1291
      %v1297 = vmul.f32 %v1191, %v1291
      %v1298 = vmul.f32 %v1192, %v1291
      %v1299 = vmul.f32 %v1193, %v1291
      %v1300 = vmul.f32 %v1194, %v1291
      %v1301 = vmul.f32 %v1195, %v1291
      %v1302 = vmul.f32 %v1196, %v1291
      %v1303 = vmul.f32 %v1197, %v1291
      %v1304 = vmul.f32 %v1198, %v1291
      %v1305 = vmul.f32 %v1199, %v1291
      %v1306 = vmul.f32 %v1200, %v1291
      %v1307 = vmul.f32 %v1201, %v1291
      %v1308 = vmul.f32 %v1202, %v1291
      %v1309 = vmul.f32 %v1203, %v1291
      %v1310 = vmul.f32 %v1204, %v1291
      %v1311 = vmul.f32 %v1205, %v1291
      %v1312 = vmul.f32 %v1206, %v1291
      %v1313 = vmul.f32 %v1207, %v1291
      %v1314 = vmul.f32 %v1208, %v1291
      %v1315 = vmul.f32 %v1209, %v1291
      %v1316 = vmul.f32 %v1210, %v1291
      %v1317 = vmul.f32 %v1211, %v1291
      %v1318 = vmul.f32 %v1212, %v1291
      %v1319 = vmul.f32 %v1213, %v1291
      %v1320 = vmul.f32 %v1214, %v1291
      %v1321 = vmul.f32 %v1215, %v1291
      %v1322 = vmul.f32 %v1216, %v1291
      %v1323 = vmul.f32 %v1217, %v1291
      %v1324 = vadd.f32 %v1256, %v1292
      %v1325 = vadd.f32 %v1257, %v1293
      %v1326 = vadd.f32 %v1258, %v1294
      %v1327 = vadd.f32 %v1259, %v1295
      %v1328 = vadd.f32 %v1260, %v1296
      %v1329 = vadd.f32 %v1261, %v1297
      %v1330 = vadd.f32 %v1262, %v1298
      %v1331 = vadd.f32 %v1263, %v1299
      %v1332 = vadd.f32 %v1264, %v1300
      %v1333 = vadd.f32 %v1265, %v1301
      %v1334 = vadd.f32 %v1266, %v1302
      %v1335 = vadd.f32 %v1267, %v1303
      %v1336 = vadd.f32 %v1268, %v1304
      %v1337 = vadd.f32 %v1269, %v1305
      %v1338 = vadd.f32 %v1270, %v1306
      %v1339 = vadd.f32 %v1271, %v1307
      %v1340 = vadd.f32 %v1272, %v1308
      %v1341 = vadd.f32 %v1273, %v1309
      %v1342 = vadd.f32 %v1274, %v1310
      %v1343 = vadd.f32 %v1275, %v1311
      %v1344 = vadd.f32 %v1276, %v1312
      %v1345 = vadd.f32 %v1277, %v1313
      %v1346 = vadd.f32 %v1278, %v1314
      %v1347 = vadd.f32 %v1279, %v1315
      %v1348 = vadd.f32 %v1280, %v1316
      %v1349 = vadd.f32 %v1281, %v1317
      %v1350 = vadd.f32 %v1282, %v1318
      %v1351 = vadd.f32 %v1283, %v1319
      %v1352 = vadd.f32 %v1284, %v1320
      %v1353 = vadd.f32 %v1285, %v1321
      %v1354 = vadd.f32 %v1286, %v1322
      %v1355 = vadd.f32 %v1287, %v1323
      %v1356 = vlaneseq
      %v1357 = vshrl.u32 %v1356, 7
      %v1358 = vsub.s32 2, %v1357
      %v1359 = vrot.slane %v696, %v1358
      %v1360 = vmul.f32 %v1188, %v1359
      %v1361 = vmul.f32 %v1189, %v1359
      %v1362 = vmul.f32 %v1190, %v1359
      %v1363 = vmul.f32 %v1191, %v1359
      %v1364 = vmul.f32 %v1192, %v1359
      %v1365 = vmul.f32 %v1193, %v1359
      %v1366 = vmul.f32 %v1194, %v1359
      %v1367 = vmul.f32 %v1195, %v1359
      %v1368 = vmul.f32 %v1196, %v1359
      %v1369 = vmul.f32 %v1197, %v1359
      %v1370 = vmul.f32 %v1198, %v1359
      %v1371 = vmul.f32 %v1199, %v1359
      %v1372 = vmul.f32 %v1200, %v1359
      %v1373 = vmul.f32 %v1201, %v1359
      %v1374 = vmul.f32 %v1202, %v1359
      %v1375 = vmul.f32 %v1203, %v1359
      %v1376 = vmul.f32 %v1204, %v1359
      %v1377 = vmul.f32 %v1205, %v1359
      %v1378 = vmul.f32 %v1206, %v1359
      %v1379 = vmul.f32 %v1207, %v1359
      %v1380 = vmul.f32 %v1208, %v1359
      %v1381 = vmul.f32 %v1209, %v1359
      %v1382 = vmul.f32 %v1210, %v1359
      %v1383 = vmul.f32 %v1211, %v1359
      %v1384 = vmul.f32 %v1212, %v1359
      %v1385 = vmul.f32 %v1213, %v1359
      %v1386 = vmul.f32 %v1214, %v1359
      %v1387 = vmul.f32 %v1215, %v1359
      %v1388 = vmul.f32 %v1216, %v1359
      %v1389 = vmul.f32 %v1217, %v1359
      %v1390 = vmul.f32 %v1218, %v1359
      %v1391 = vmul.f32 %v1219, %v1359
      %v1392 = vadd.f32 %v1324, %v1360
      %v1393 = vadd.f32 %v1325, %v1361
      %v1394 = vadd.f32 %v1326, %v1362
      %v1395 = vadd.f32 %v1327, %v1363
      %v1396 = vadd.f32 %v1328, %v1364
      %v1397 = vadd.f32 %v1329, %v1365
      %v1398 = vadd.f32 %v1330, %v1366
      %v1399 = vadd.f32 %v1331, %v1367
      %v1400 = vadd.f32 %v1332, %v1368
      %v1401 = vadd.f32 %v1333, %v1369
      %v1402 = vadd.f32 %v1334, %v1370
      %v1403 = vadd.f32 %v1335, %v1371
      %v1404 = vadd.f32 %v1336, %v1372
      %v1405 = vadd.f32 %v1337, %v1373
      %v1406 = vadd.f32 %v1338, %v1374
      %v1407 = vadd.f32 %v1339, %v1375
      %v1408 = vadd.f32 %v1340, %v1376
      %v1409 = vadd.f32 %v1341, %v1377
      %v1410 = vadd.f32 %v1342, %v1378
      %v1411 = vadd.f32 %v1343, %v1379
      %v1412 = vadd.f32 %v1344, %v1380
      %v1413 = vadd.f32 %v1345, %v1381
      %v1414 = vadd.f32 %v1346, %v1382
      %v1415 = vadd.f32 %v1347, %v1383
      %v1416 = vadd.f32 %v1348, %v1384
      %v1417 = vadd.f32 %v1349, %v1385
      %v1418 = vadd.f32 %v1350, %v1386
      %v1419 = vadd.f32 %v1351, %v1387
      %v1420 = vadd.f32 %v1352, %v1388
      %v1421 = vadd.f32 %v1353, %v1389
      %v1422 = vadd.f32 %v1354, %v1390
      %v1423 = vadd.f32 %v1355, %v1391
      %v1424 = vmax.f32 %v1392, 0.0
      %v1425 = vmax.f32 %v1393, 0.0
      %v1426 = vmax.f32 %v1394, 0.0
      %v1427 = vmax.f32 %v1395, 0.0
      %v1428 = vmax.f32 %v1396, 0.0
      %v1429 = vmax.f32 %v1397, 0.0
      %v1430 = vmax.f32 %v1398, 0.0
      %v1431 = vmax.f32 %v1399, 0.0
      %v1432 = vmax.f32 %v1400, 0.0
      %v1433 = vmax.f32 %v1401, 0.0
      %v1434 = vmax.f32 %v1402, 0.0
      %v1435 = vmax.f32 %v1403, 0.0
      %v1436 = vmax.f32 %v1404, 0.0
      %v1437 = vmax.f32 %v1405, 0.0
      %v1438 = vmax.f32 %v1406, 0.0
      %v1439 = vmax.f32 %v1407, 0.0
      %v1440 = vmax.f32 %v1408, 0.0
      %v1441 = vmax.f32 %v1409, 0.0
      %v1442 = vmax.f32 %v1410, 0.0
      %v1443 = vmax.f32 %v1411, 0.0
      %v1444 = vmax.f32 %v1412, 0.0
      %v1445 = vmax.f32 %v1413, 0.0
      %v1446 = vmax.f32 %v1414, 0.0
      %v1447 = vmax.f32 %v1415, 0.0
      %v1448 = vmax.f32 %v1416, 0.0
      %v1449 = vmax.f32 %v1417, 0.0
      %v1450 = vmax.f32 %v1418, 0.0
      %v1451 = vmax.f32 %v1419, 0.0
      %v1452 = vmax.f32 %v1420, 0.0
      %v1453 = vmax.f32 %v1421, 0.0
      %v1454 = vmax.f32 %v1422, 0.0
      %v1455 = vmax.f32 %v1423, 0.0
      %v1456 = vmin.f32 %v1424, 6.0
      %v1457 = vmin.f32 %v1425, 6.0
      %v1458 = vmin.f32 %v1426, 6.0
      %v1459 = vmin.f32 %v1427, 6.0
      %v1460 = vmin.f32 %v1428, 6.0
      %v1461 = vmin.f32 %v1429, 6.0
      %v1462 = vmin.f32 %v1430, 6.0
      %v1463 = vmin.f32 %v1431, 6.0
      %v1464 = vmin.f32 %v1432, 6.0
      %v1465 = vmin.f32 %v1433, 6.0
      %v1466 = vmin.f32 %v1434, 6.0
      %v1467 = vmin.f32 %v1435, 6.0
      %v1468 = vmin.f32 %v1436, 6.0
      %v1469 = vmin.f32 %v1437, 6.0
      %v1470 = vmin.f32 %v1438, 6.0
      %v1471 = vmin.f32 %v1439, 6.0
      %v1472 = vmin.f32 %v1440, 6.0
      %v1473 = vmin.f32 %v1441, 6.0
      %v1474 = vmin.f32 %v1442, 6.0
      %v1475 = vmin.f32 %v1443, 6.0
      %v1476 = vmin.f32 %v1444, 6.0
      %v1477 = vmin.f32 %v1445, 6.0
      %v1478 = vmin.f32 %v1446, 6.0
      %v1479 = vmin.f32 %v1447, 6.0
      %v1480 = vmin.f32 %v1448, 6.0
      %v1481 = vmin.f32 %v1449, 6.0
      %v1482 = vmin.f32 %v1450, 6.0
      %v1483 = vmin.f32 %v1451, 6.0
      %v1484 = vmin.f32 %v1452, 6.0
      %v1485 = vmin.f32 %v1453, 6.0
      %v1486 = vmin.f32 %v1454, 6.0
      %v1487 = vmin.f32 %v1455, 6.0
      %v1488 = vpack.c.bf16 %v1457, %v1456
      %v1489 = vpack.c.bf16 %v1459, %v1458
      %v1490 = vpack.c.bf16 %v1461, %v1460
      %v1491 = vpack.c.bf16 %v1463, %v1462
      %v1492 = vpack.c.bf16 %v1465, %v1464
      %v1493 = vpack.c.bf16 %v1467, %v1466
      %v1494 = vpack.c.bf16 %v1469, %v1468
      %v1495 = vpack.c.bf16 %v1471, %v1470
      %v1496 = vpack.c.bf16 %v1473, %v1472
      %v1497 = vpack.c.bf16 %v1475, %v1474
      %v1498 = vpack.c.bf16 %v1477, %v1476
      %v1499 = vpack.c.bf16 %v1479, %v1478
      %v1500 = vpack.c.bf16 %v1481, %v1480
      %v1501 = vpack.c.bf16 %v1483, %v1482
      %v1502 = vpack.c.bf16 %v1485, %v1484
      %v1503 = vpack.c.bf16 %v1487, %v1486
      %v1504 = vld [vmem:[%s5] sm:$0xf]
      %v1505 = vld [vmem:[%s5 + $0x4] sm:$0xf]
      %v1506 = vld [vmem:[%s5 + $0x8] sm:$0xf]
      %v1507 = vld [vmem:[%s5 + $0xc] sm:$0xf]
      %v1508 = vld [vmem:[%s6] sm:$0x1]
      %v1510 = vlaneseq
      %v1511 = vshrl.u32 %v1510, 7
      %v1512 = vsub.s32 0, %v1511
      %v1513 = vrot.slane %v1508, %v1512
      %v1519 = vunpack.c.l.b16 %v1504
      %v1520 = vunpack.c.l.b16 %v1505
      %v1521 = vunpack.c.l.b16 %v1506
      %v1522 = vunpack.c.l.b16 %v1507
      %v1523 = vpack.c.b16 %v1520, %v1519
      %v1524 = vpack.c.b16 %v1522, %v1521
      %v1528 = vsel %vm614, %v1488, 0
      %v1531 = vsel %vm614, %v1489, 0
      %v1534 = vsel %vm614, %v1490, 0
      %v1537 = vsel %vm614, %v1491, 0
      %v1540 = vsel %vm614, %v1492, 0
      %v1543 = vsel %vm614, %v1493, 0
      %v1546 = vsel %vm614, %v1494, 0
      %v1549 = vsel %vm614, %v1495, 0
      %v1552 = vsel %vm614, %v1496, 0
      %v1555 = vsel %vm614, %v1497, 0
      %v1558 = vsel %vm614, %v1498, 0
      %v1561 = vsel %vm614, %v1499, 0
      %v1564 = vsel %vm614, %v1500, 0
      %v1567 = vsel %vm614, %v1501, 0
      %v1570 = vsel %vm614, %v1502, 0
      %v1573 = vsel %vm614, %v1503, 0
      %1575 = vmatprep.subr.bf16.mxu0 0
      %1576 = vmatpush1.bf16.msra.mxu0 %v1523
      %1577 = vmatprep.subr.bf16.mxu0 0
      %1578 = vmatpush1.bf16.msra.mxu0 %v1524
      %1579 = vmatprep.subr.bf16.mxu0 0
      %1580 = vmatpush1.bf16.msra.mxu0 0
      %1581 = vmatprep.subr.bf16.mxu0 0
      %1582 = vmatpush1.bf16.msra.mxu0 0
      %1583 = vmatprep.subr.bf16.mxu0 0
      %1584 = vmatpush1.bf16.msra.mxu0 0
      %1585 = vmatprep.subr.bf16.mxu0 0
      %1586 = vmatpush1.bf16.msra.mxu0 0
      %1587 = vmatprep.subr.bf16.mxu0 0
      %1588 = vmatpush1.bf16.msra.mxu0 0
      %1589 = vmatprep.subr.bf16.mxu0 0
      %1590 = vmatpush1.bf16.msra.mxu0 0
      %1591 = vmatprep.subr.bf16.mxu0 0
      %1592 = vmatpush1.bf16.msra.mxu0 0
      %1593 = vmatprep.subr.bf16.mxu0 0
      %1594 = vmatpush1.bf16.msra.mxu0 0
      %1595 = vmatprep.subr.bf16.mxu0 0
      %1596 = vmatpush1.bf16.msra.mxu0 0
      %1597 = vmatprep.subr.bf16.mxu0 0
      %1598 = vmatpush1.bf16.msra.mxu0 0
      %1599 = vmatprep.subr.bf16.mxu0 0
      %1600 = vmatpush1.bf16.msra.mxu0 0
      %1601 = vmatprep.subr.bf16.mxu0 0
      %1602 = vmatpush1.bf16.msra.mxu0 0
      %1603 = vmatprep.subr.bf16.mxu0 0
      %1604 = vmatpush1.bf16.msra.mxu0 0
      %1605 = vmatprep.subr.bf16.mxu0 0
      %1606 = vmatpush1.bf16.msra.mxu0 0
      %1607 = vmatprep.mubr.bf16.mxu0 0
      %1608 = vmatmul.mubr.bf16.gmra.mrb[0].mxu0 %v1528
      %v1609 = vpop.f32.mrb[0].mxu0
      %v1610 = vadd.f32 %v1513, %v1609
      %v1611 = vpop.f32.mrb[0].mxu0
      %v1612 = vpop.f32.mrb[0].mxu0
      %v1613 = vadd.f32 %v1513, %v1612
      %v1614 = vpop.f32.mrb[0].mxu0
      %1615 = vmatprep.mubr.bf16.mxu0 0
      %1616 = vmatmul.mubr.bf16.gmra.mrb[0].mxu0 %v1531
      %v1617 = vpop.f32.mrb[0].mxu0
      %v1618 = vadd.f32 %v1513, %v1617
      %v1619 = vpop.f32.mrb[0].mxu0
      %v1620 = vpop.f32.mrb[0].mxu0
      %v1621 = vadd.f32 %v1513, %v1620
      %v1622 = vpop.f32.mrb[0].mxu0
      %1623 = vmatprep.mubr.bf16.mxu0 0
      %1624 = vmatmul.mubr.bf16.gmra.mrb[0].mxu0 %v1534
      %v1625 = vpop.f32.mrb[0].mxu0
      %v1626 = vadd.f32 %v1513, %v1625
      %v1627 = vpop.f32.mrb[0].mxu0
      %v1628 = vpop.f32.mrb[0].mxu0
      %v1629 = vadd.f32 %v1513, %v1628
      %v1630 = vpop.f32.mrb[0].mxu0
      %1631 = vmatprep.mubr.bf16.mxu0 0
      %1632 = vmatmul.mubr.bf16.gmra.mrb[0].mxu0 %v1537
      %v1633 = vpop.f32.mrb[0].mxu0
      %v1634 = vadd.f32 %v1513, %v1633
      %v1635 = vpop.f32.mrb[0].mxu0
      %v1636 = vpop.f32.mrb[0].mxu0
      %v1637 = vadd.f32 %v1513, %v1636
      %v1638 = vpop.f32.mrb[0].mxu0
      %1639 = vmatprep.mubr.bf16.mxu0 0
      %1640 = vmatmul.mubr.bf16.gmra.mrb[0].mxu0 %v1540
      %v1641 = vpop.f32.mrb[0].mxu0
      %v1642 = vadd.f32 %v1513, %v1641
      %v1643 = vpop.f32.mrb[0].mxu0
      %v1644 = vpop.f32.mrb[0].mxu0
      %v1645 = vadd.f32 %v1513, %v1644
      %v1646 = vpop.f32.mrb[0].mxu0
      %1647 = vmatprep.mubr.bf16.mxu0 0
      %1648 = vmatmul.mubr.bf16.gmra.mrb[0].mxu0 %v1543
      %v1649 = vpop.f32.mrb[0].mxu0
      %v1650 = vadd.f32 %v1513, %v1649
      %v1651 = vpop.f32.mrb[0].mxu0
      %v1652 = vpop.f32.mrb[0].mxu0
      %v1653 = vadd.f32 %v1513, %v1652
      %v1654 = vpop.f32.mrb[0].mxu0
      %1655 = vmatprep.mubr.bf16.mxu0 0
      %1656 = vmatmul.mubr.bf16.gmra.mrb[0].mxu0 %v1546
      %v1657 = vpop.f32.mrb[0].mxu0
      %v1658 = vadd.f32 %v1513, %v1657
      %v1659 = vpop.f32.mrb[0].mxu0
      %v1660 = vpop.f32.mrb[0].mxu0
      %v1661 = vadd.f32 %v1513, %v1660
      %v1662 = vpop.f32.mrb[0].mxu0
      %1663 = vmatprep.mubr.bf16.mxu0 0
      %1664 = vmatmul.mubr.bf16.gmra.mrb[0].mxu0 %v1549
      %v1665 = vpop.f32.mrb[0].mxu0
      %v1666 = vadd.f32 %v1513, %v1665
      %v1667 = vpop.f32.mrb[0].mxu0
      %v1668 = vpop.f32.mrb[0].mxu0
      %v1669 = vadd.f32 %v1513, %v1668
      %v1670 = vpop.f32.mrb[0].mxu0
      %1671 = vmatprep.mubr.bf16.mxu0 0
      %1672 = vmatmul.mubr.bf16.gmra.mrb[0].mxu0 %v1552
      %v1673 = vpop.f32.mrb[0].mxu0
      %v1674 = vadd.f32 %v1513, %v1673
      %v1675 = vpop.f32.mrb[0].mxu0
      %v1676 = vpop.f32.mrb[0].mxu0
      %v1677 = vadd.f32 %v1513, %v1676
      %v1678 = vpop.f32.mrb[0].mxu0
      %1679 = vmatprep.mubr.bf16.mxu0 0
      %1680 = vmatmul.mubr.bf16.gmra.mrb[0].mxu0 %v1555
      %v1681 = vpop.f32.mrb[0].mxu0
      %v1682 = vadd.f32 %v1513, %v1681
      %v1683 = vpop.f32.mrb[0].mxu0
      %v1684 = vpop.f32.mrb[0].mxu0
      %v1685 = vadd.f32 %v1513, %v1684
      %v1686 = vpop.f32.mrb[0].mxu0
      %1687 = vmatprep.mubr.bf16.mxu0 0
      %1688 = vmatmul.mubr.bf16.gmra.mrb[0].mxu0 %v1558
      %v1689 = vpop.f32.mrb[0].mxu0
      %v1690 = vadd.f32 %v1513, %v1689
      %v1691 = vpop.f32.mrb[0].mxu0
      %v1692 = vpop.f32.mrb[0].mxu0
      %v1693 = vadd.f32 %v1513, %v1692
      %v1694 = vpop.f32.mrb[0].mxu0
      %1695 = vmatprep.mubr.bf16.mxu0 0
      %1696 = vmatmul.mubr.bf16.gmra.mrb[0].mxu0 %v1561
      %v1697 = vpop.f32.mrb[0].mxu0
      %v1698 = vadd.f32 %v1513, %v1697
      %v1699 = vpop.f32.mrb[0].mxu0
      %v1700 = vpop.f32.mrb[0].mxu0
      %v1701 = vadd.f32 %v1513, %v1700
      %v1702 = vpop.f32.mrb[0].mxu0
      %1703 = vmatprep.mubr.bf16.mxu0 0
      %1704 = vmatmul.mubr.bf16.gmra.mrb[0].mxu0 %v1564
      %v1705 = vpop.f32.mrb[0].mxu0
      %v1706 = vadd.f32 %v1513, %v1705
      %v1707 = vpop.f32.mrb[0].mxu0
      %v1708 = vpop.f32.mrb[0].mxu0
      %v1709 = vadd.f32 %v1513, %v1708
      %v1710 = vpop.f32.mrb[0].mxu0
      %1711 = vmatprep.mubr.bf16.mxu0 0
      %1712 = vmatmul.mubr.bf16.gmra.mrb[0].mxu0 %v1567
      %v1713 = vpop.f32.mrb[0].mxu0
      %v1714 = vadd.f32 %v1513, %v1713
      %v1715 = vpop.f32.mrb[0].mxu0
      %v1716 = vpop.f32.mrb[0].mxu0
      %v1717 = vadd.f32 %v1513, %v1716
      %v1718 = vpop.f32.mrb[0].mxu0
      %1719 = vmatprep.mubr.bf16.mxu0 0
      %1720 = vmatmul.mubr.bf16.gmra.mrb[0].mxu0 %v1570
      %v1721 = vpop.f32.mrb[0].mxu0
      %v1722 = vadd.f32 %v1513, %v1721
      %v1723 = vpop.f32.mrb[0].mxu0
      %v1724 = vpop.f32.mrb[0].mxu0
      %v1725 = vadd.f32 %v1513, %v1724
      %v1726 = vpop.f32.mrb[0].mxu0
      %1727 = vmatprep.mubr.bf16.mxu0 0
      %1728 = vmatmul.mubr.bf16.gmra.mrb[0].mxu0 %v1573
      %v1729 = vpop.f32.mrb[0].mxu0
      %v1730 = vadd.f32 %v1513, %v1729
      %v1731 = vpop.f32.mrb[0].mxu0
      %v1732 = vpop.f32.mrb[0].mxu0
      %v1733 = vadd.f32 %v1513, %v1732
      %v1734 = vpop.f32.mrb[0].mxu0
      %1735 = vdwg.mxu0
      %v1736 = vadd.f32 %v1610, %v280
      %v1737 = vadd.f32 %v1613, %v281
      %v1738 = vadd.f32 %v1618, %v282
      %v1739 = vadd.f32 %v1621, %v283
      %v1740 = vadd.f32 %v1626, %v284
      %v1741 = vadd.f32 %v1629, %v285
      %v1742 = vadd.f32 %v1634, %v286
      %v1743 = vadd.f32 %v1637, %v287
      %v1744 = vadd.f32 %v1642, %v288
      %v1745 = vadd.f32 %v1645, %v289
      %v1746 = vadd.f32 %v1650, %v290
      %v1747 = vadd.f32 %v1653, %v291
      %v1748 = vadd.f32 %v1658, %v292
      %v1749 = vadd.f32 %v1661, %v293
      %v1750 = vadd.f32 %v1666, %v294
      %v1751 = vadd.f32 %v1669, %v295
      %v1752 = vadd.f32 %v1674, %v296
      %v1753 = vadd.f32 %v1677, %v297
      %v1754 = vadd.f32 %v1682, %v298
      %v1755 = vadd.f32 %v1685, %v299
      %v1756 = vadd.f32 %v1690, %v300
      %v1757 = vadd.f32 %v1693, %v301
      %v1758 = vadd.f32 %v1698, %v302
      %v1759 = vadd.f32 %v1701, %v303
      %v1760 = vadd.f32 %v1706, %v304
      %v1761 = vadd.f32 %v1709, %v305
      %v1762 = vadd.f32 %v1714, %v306
      %v1763 = vadd.f32 %v1717, %v307
      %v1764 = vadd.f32 %v1722, %v308
      %v1765 = vadd.f32 %v1725, %v309
      %v1766 = vadd.f32 %v1730, %v310
      %v1767 = vadd.f32 %v1733, %v311
      %1768 = vst.msk [vmem:[%s278] sm:$0xff] %vm336, %v1736
      %1769 = vst.msk [vmem:[%s278 + $0x8] sm:$0xff] %vm336, %v1737
      %1770 = vst.msk [vmem:[%s278 + $0x10] sm:$0xff] %vm336, %v1738
      %1771 = vst.msk [vmem:[%s278 + $0x18] sm:$0xff] %vm336, %v1739
      %1772 = vst.msk [vmem:[%s278 + $0x20] sm:$0xff] %vm336, %v1740
      %1773 = vst.msk [vmem:[%s278 + $0x28] sm:$0xff] %vm336, %v1741
      %1774 = vst.msk [vmem:[%s278 + $0x30] sm:$0xff] %vm336, %v1742
      %1775 = vst.msk [vmem:[%s278 + $0x38] sm:$0xff] %vm336, %v1743
      %1776 = vst.msk [vmem:[%s278 + $0x40] sm:$0xff] %vm336, %v1744
      %1777 = vst.msk [vmem:[%s278 + $0x48] sm:$0xff] %vm336, %v1745
      %1778 = vst.msk [vmem:[%s278 + $0x50] sm:$0xff] %vm336, %v1746
      %1779 = vst.msk [vmem:[%s278 + $0x58] sm:$0xff] %vm336, %v1747
      %1780 = vst.msk [vmem:[%s278 + $0x60] sm:$0xff] %vm336, %v1748
      %1781 = vst.msk [vmem:[%s278 + $0x68] sm:$0xff] %vm336, %v1749
      %1782 = vst.msk [vmem:[%s278 + $0x70] sm:$0xff] %vm336, %v1750
      %1783 = vst.msk [vmem:[%s278 + $0x78] sm:$0xff] %vm336, %v1751
      %1784 = vst.msk [vmem:[%s278 + $0x80] sm:$0xff] %vm336, %v1752
      %1785 = vst.msk [vmem:[%s278 + $0x88] sm:$0xff] %vm336, %v1753
      %1786 = vst.msk [vmem:[%s278 + $0x90] sm:$0xff] %vm336, %v1754
      %1787 = vst.msk [vmem:[%s278 + $0x98] sm:$0xff] %vm336, %v1755
      %1788 = vst.msk [vmem:[%s278 + $0xa0] sm:$0xff] %vm336, %v1756
      %1789 = vst.msk [vmem:[%s278 + $0xa8] sm:$0xff] %vm336, %v1757
      %1790 = vst.msk [vmem:[%s278 + $0xb0] sm:$0xff] %vm336, %v1758
      %1791 = vst.msk [vmem:[%s278 + $0xb8] sm:$0xff] %vm336, %v1759
      %1792 = vst.msk [vmem:[%s278 + $0xc0] sm:$0xff] %vm336, %v1760
      %1793 = vst.msk [vmem:[%s278 + $0xc8] sm:$0xff] %vm336, %v1761
      %1794 = vst.msk [vmem:[%s278 + $0xd0] sm:$0xff] %vm336, %v1762
      %1795 = vst.msk [vmem:[%s278 + $0xd8] sm:$0xff] %vm336, %v1763
      %1796 = vst.msk [vmem:[%s278 + $0xe0] sm:$0xff] %vm336, %v1764
      %1797 = vst.msk [vmem:[%s278 + $0xe8] sm:$0xff] %vm336, %v1765
      %1798 = vst.msk [vmem:[%s278 + $0xf0] sm:$0xff] %vm336, %v1766
      %1799 = vst.msk [vmem:[%s278 + $0xf8] sm:$0xff] %vm336, %v1767
      %p1800 = scmp.lt.s32.totalorder %s18, 1
      %s1801 = scalar_select %p1800, %s18, 1
      %s1802 = smul.addr %s1801, 32
      %s1803 = smul.addr %s1802, 8
      %s1804 = scalar_lea.vmem %s7, %s1803
      // Predicated region
      $region49: #{tpu_custom_call.1} parent=47 // pred_check
        %p1805 = pneg %p188
      $region50: #{tpu_custom_call.1} parent=47 // pred_check_branch
        %1807 = sbr.rel (%p1805) target = $region52
      $region51: #{tpu_custom_call.1} parent=47 // pred_region
        _
      $region52: #{tpu_custom_call.1} parent=47 // pred_fallthru
        _
    $region48: #{tpu_custom_call.1} parent=5 // pred_fallthru
      _
    %p1808 = scmp.le.s32.totalorder 2, %s13
    // Predicated region
    $region53: #{tpu_custom_call.1} parent=5 // pred_check
      %p1809 = pneg %p1808
    $region54: #{tpu_custom_call.1} parent=5 // pred_check_branch
      %1811 = sbr.rel (%p1809) target = $region56
    $region55: #{tpu_custom_call.1} parent=5 // pred_region
      %s1812 = ssub.s32 %s13, 2
      // Predicated region
      $region57: #{tpu_custom_call.1} parent=55 // pred_check
        %p1813 = pneg %p194
      $region58: #{tpu_custom_call.1} parent=55 // pred_check_branch
        %1815 = sbr.rel (%p1813) target = $region60
      $region59: #{tpu_custom_call.1} parent=55 // pred_region
        %p1816 = scmp.lt.s32.totalorder %s19, 1
        %s1817 = scalar_select %p1816, %s19, 1
        %s1818 = smul.addr %s1817, 32
        %s1819 = smul.addr %s1818, 8
        %s1820 = scalar_lea.vmem %s7, %s1819
      $region60: #{tpu_custom_call.1} parent=55 // pred_fallthru
        _
    $region56: #{tpu_custom_call.1} parent=5 // pred_fallthru
      _
  $region6: #{tpu_custom_call.1} parent=0 // loop_footer
    %s17 = sadd.s32 1, %s13
  $region7: #{tpu_custom_call.1} parent=0 // loop_footer_branch
    %12 = sbr.rel target = $region3
  $region8: #{tpu_custom_call.1} parent=0 // loop_exit
    _

</llo_original>
